<compile_context>
chip_gen: v7x
topology: tpu7x:2x2x1
jax: 0.10.0
libtpu: 0.0.40
codegen_flags: <defaults>
</compile_context>

<pallas_src>
import numpy as np
import jax
import jax.numpy as jnp
from jax.experimental import pallas as pl
from jax.experimental.pallas import tpu as pltpu

# --------------------------------------------------------------------------- config
OPERATOR_NAME = ["zero", "identity", "linear", "relu_linear"]
OPERATOR_COST = np.array([0.0, 0.5, 1.0, 1.5], dtype=np.float32)

B = 2                   # batch
L = 8                   # loader_max_len
C = 32                  # model_num_hidden
T_HIDDEN = 32           # search_teacher_hidden
NUM_CELLS = 2           # model_num_cell == student_layers
NUM_NODE = 2            # model_num_node
TEACHER_LAYERS = 3      # search_teacher_layers
NUM_ITEMS = 10
NUM_AUX = 2
NUM_CLASS = NUM_ITEMS + 1            # 11
VOCAB = NUM_ITEMS + NUM_AUX          # 12
VOCAB_PAD = 16                       # vocab rows padded for sublane alignment
NUM_OPS = len(OPERATOR_NAME)
TEMPERATURE = 5.0                    # search_temperature (init)
KL_TEMPERATURE = 1.0
N_TOK = B * L                        # 16 rows on the sublane axis

EDGES_PER_CELL = sum(node + 1 for node in range(NUM_NODE))    # 3 (alphas shared across cells)
assert NUM_NODE == 2, "the kernel unrolls the 2-node DARTS cell explicitly"

PAD32 = 32                                   # lane padding for the 11-wide class dims
GRP_HEAD_W = T_HIDDEN + 2 * C                # 96: [align(cell input) | w(n0,e0) | w(n1,e0)]
GRP_TAIL_W = T_HIDDEN + PAD32                # 64: [align(last output) | w_out(pad)]
W_TOTAL = NUM_CELLS * (GRP_HEAD_W + C) + GRP_TAIL_W           # 320
TEACH_W = T_HIDDEN * (1 + TEACHER_LAYERS)    # 128: [t_emb | t_hid0 | t_hid1 | t_hid2]
LAB_W = 2 * PAD32                            # 64: [label one-hot(pad) | teacher logits(pad)]


# --------------------------------------------------------------------------- the one fused kernel
def _student_search_kernel(alpha_ref, xoh_ref, emb_ref, w_ref, lab_ref, teach_ref,
                           ce_ref, mse_ref, kdh_ref, kdl_ref):
    """Entire StudentSearch forward (SearchModel + all loss reductions) in one launch.

    alpha_ref : SMEM (EDGES_PER_CELL*NUM_OPS,) f32   hard gumbel-softmax one-hots
    xoh_ref   : VMEM (N_TOK, VOCAB_PAD)              token one-hot (embedding gather)
    emb_ref   : VMEM (VOCAB_PAD, C)                  embedding table (row padded)
    w_ref     : VMEM (C, W_TOTAL)                    lane-dense weight slab (see init_params)
    lab_ref   : VMEM (N_TOK, LAB_W)                  [label one-hot*mask pad32 | teacher logits pad32]
    teach_ref : VMEM (N_TOK, TEACH_W)                [teacher_emb | teacher_hidden_0..2]
    outputs   : 4x VMEM (1, 1) f32                   ce / mse_emb / kd_hidden / kd_logits
    """
    # -------- SearchModel forward: 6 MXU dots, activations never leave vregs --------
    w = w_ref[...]                                                # (C, W_TOTAL)
    x = jnp.dot(xoh_ref[...], emb_ref[...],
                preferred_element_type=jnp.float32)               # embedding gather (N, C)

    # hard one-hot mixing coefficients, shared across cells (op 0 == "zero" contributes nothing)
    a_id = [alpha_ref[e * NUM_OPS + 1] for e in range(EDGES_PER_CELL)]
    a_lin = [alpha_ref[e * NUM_OPS + 2] for e in range(EDGES_PER_CELL)]
    a_rel = [alpha_ref[e * NUM_OPS + 3] for e in range(EDGES_PER_CELL)]

    aligned = []            # [aligned_emb, aligned_cell_0, ..., aligned_cell_{S-1}]
    h = x
    off = 0
    for _ in range(NUM_CELLS):
        # edges (n0,e0) and (n1,e0) share LHS == cell input; the alignment projection of
        # that same tensor is packed alongside -> one (N,C)@(C,96) dot.
        g = jnp.dot(h, w[:, off:off + GRP_HEAD_W], preferred_element_type=jnp.float32)
        off += GRP_HEAD_W
        aligned.append(g[:, 0:T_HIDDEN])
        lin0 = g[:, T_HIDDEN:T_HIDDEN + C]
        lin1 = g[:, T_HIDDEN + C:T_HIDDEN + 2 * C]
        n0 = a_id[0] * h + a_lin[0] * lin0 + a_rel[0] * jnp.maximum(lin0, 0.0)
        # edge (n1,e1): LHS == node-0 output
        lin2 = jnp.dot(n0, w[:, off:off + C], preferred_element_type=jnp.float32)
        off += C
        h = (a_id[1] * h + a_lin[1] * lin1 + a_rel[1] * jnp.maximum(lin1, 0.0)
             + a_id[2] * n0 + a_lin[2] * lin2 + a_rel[2] * jnp.maximum(lin2, 0.0))
    # final cell output: alignment projection + class logits fused into one dot
    tail = jnp.dot(h, w[:, off:off + GRP_TAIL_W], preferred_element_type=jnp.float32)
    aligned.append(tail[:, 0:T_HIDDEN])
    s_out = tail[:, T_HIDDEN:T_HIDDEN + NUM_CLASS]                # (N, 11) student logits

    emb_aligned = aligned[0]
    cells_aligned = aligned[1:]

    # -------- losses -----------------------------------------------------------------
    lab = lab_ref[...]
    teach = teach_ref[...]
    onehot = lab[:, 0:NUM_CLASS]                                  # ignore_index rows already zeroed
    t_out = lab[:, PAD32:PAD32 + NUM_CLASS]                       # teacher logits

    def sum_all(v):   # full reduction kept 2-D: (R, K) -> (1, 1); no rank-0 intermediates
        return jnp.sum(jnp.sum(v, axis=-1, keepdims=True), axis=0, keepdims=True)

    # task loss: cross entropy, mean over labels != 0 (ignore_index=0 folded into the one-hot)
    m = jnp.max(s_out, axis=-1, keepdims=True)
    lse = m + jnp.log(jnp.sum(jnp.exp(s_out - m), axis=-1, keepdims=True))     # (N, 1)
    mask = jnp.sum(onehot, axis=-1, keepdims=True)                             # 1.0 iff label != 0
    total = sum_all(mask * lse) - sum_all(onehot * s_out)
    count = sum_all(mask)
    # PyTorch returns NaN when every label is ignored; we return 0 in that (unused) case.
    ce_ref[...] = total / jnp.maximum(count, 1.0)

    # embedding distillation: MSE(aligned_student_emb, teacher_emb)
    d = emb_aligned - teach[:, 0:T_HIDDEN]
    mse_ref[...] = sum_all(d * d) * (1.0 / (N_TOK * T_HIDDEN))

    # hidden EMD distillation.
    #   distance[i][j+S] = layer_distill_loss(teacher=s_hid_i, student=t_hid_j)
    #                    = KLDiv(log_softmax(t_j/T), softmax(s_i/T), 'batchmean')
    #                    = sum softmax(s_i) * (log_softmax(s_i) - log_softmax(t_j)) / B
    # exp(x-m) is computed once per softmax and reused for probabilities via an EUP
    # approximate reciprocal; reverse-direction KLs are skipped (uniform plan weight 0).
    def log_softmax_and_prob(v):
        mm = jnp.max(v, axis=-1, keepdims=True)
        e = jnp.exp(v - mm)
        s = jnp.sum(e, axis=-1, keepdims=True)
        return (v - mm) - jnp.log(s), e * pl.reciprocal(s, approx=True)

    def log_softmax(v):
        mm = jnp.max(v, axis=-1, keepdims=True)
        return (v - mm) - jnp.log(jnp.sum(jnp.exp(v - mm), axis=-1, keepdims=True))

    inv_t = 1.0 / KL_TEMPERATURE
    ls_s, p_s = [], []
    for i in range(NUM_CELLS):
        ls, p = log_softmax_and_prob(cells_aligned[i] * inv_t)
        ls_s.append(ls)
        p_s.append(p)
    ls_t = [log_softmax(teach[:, T_HIDDEN * (1 + j):T_HIDDEN * (2 + j)] * inv_t)
            for j in range(TEACHER_LAYERS)]

    kd = jnp.zeros((1, 1), jnp.float32)
    for i in range(NUM_CELLS):
        for j in range(TEACHER_LAYERS):
            kd = kd + sum_all(p_s[i] * (ls_s[i] - ls_t[j]))
    # TODO(synk): uniform feasible flow stands in for pyemd's optimal transport plan.
    flow = 1.0 / (NUM_CELLS * TEACHER_LAYERS)
    # KLDivLoss('batchmean') on (B, L, K) tensors divides by B (not B*L).
    kdh_ref[...] = kd * (flow / B)

    # logits distillation: layer_distill_loss(out_s, out_t) -> teacher = student logits,
    # student = teacher logits (argument order of the original call).
    ls_so, p_so = log_softmax_and_prob(s_out * inv_t)
    ls_to = log_softmax(t_out * inv_t)
    kdl_ref[...] = sum_all(p_so * (ls_so - ls_to)) * (1.0 / B)


def fused_student_search(alpha_flat, x_onehot, emb_pad, w_slab, lab_slab, teach_slab):
    scalar_out = jax.ShapeDtypeStruct((1, 1), jnp.float32)
    scalar_spec = pl.BlockSpec((1, 1), lambda i: (0, 0))
    return pl.pallas_call(
        _student_search_kernel,
        out_shape=(scalar_out,) * 4,
        grid=(1,),
        in_specs=[
            pl.BlockSpec(memory_space=pltpu.MemorySpace.SMEM),        # alphas (hard one-hots)
            pl.BlockSpec((N_TOK, VOCAB_PAD), lambda i: (0, 0)),       # token one-hot
            pl.BlockSpec((VOCAB_PAD, C), lambda i: (0, 0)),           # embedding table
            pl.BlockSpec((C, W_TOTAL), lambda i: (0, 0)),             # lane-dense weight slab
            pl.BlockSpec((N_TOK, LAB_W), lambda i: (0, 0)),           # labels + teacher logits
            pl.BlockSpec((N_TOK, TEACH_W), lambda i: (0, 0)),         # teacher emb + hiddens
        ],
        out_specs=(scalar_spec,) * 4,
        compiler_params=pltpu.CompilerParams(
            # Single grid point (whole problem is 16 rows); the token axis would only be
            # blocked and marked "parallel" (v7x second TensorCore) once B*L grows.
            dimension_semantics=("arbitrary",)),
    )(alpha_flat, x_onehot, emb_pad, w_slab, lab_slab, teach_slab)


# --------------------------------------------------------------------------- JAX glue
def get_mixed_alpha_arch(alpha_arch, key, tau):
    """F.gumbel_softmax(get_logits(alpha), tau, hard=True) forward value, all edges at once."""
    alpha_cat = jnp.concatenate([a.reshape(-1, NUM_OPS) for a in alpha_arch], axis=0)
    g = jax.random.gumbel(key, alpha_cat.shape, dtype=jnp.float32)
    y = (alpha_cat + g) / tau                  # get_logits() treated as identity
    return jax.nn.one_hot(jnp.argmax(y, axis=-1), NUM_OPS, dtype=jnp.float32)   # (EDGES, |O|)


def compute_loss_model_efficiency(alpha_flat):
    cost = jnp.asarray(np.tile(OPERATOR_COST, EDGES_PER_CELL))
    return jnp.sum(alpha_flat * cost)


def student_search_forward(params, alpha_arch, input_seqs, label_seqs,
                           teacher_emb, teacher_hidden, teacher_out, gumbel_key):
    # architecture sampling (vectorized); row order matches the kernel's edge unroll order
    alpha_mixed = get_mixed_alpha_arch(alpha_arch, gumbel_key, TEMPERATURE)
    alpha_flat = alpha_mixed.reshape(-1)                                        # (EDGES*|O|,)

    # token one-hot -> the kernel performs the embedding gather as a tiny matmul
    x_onehot = jax.nn.one_hot(input_seqs.reshape(-1), VOCAB_PAD, dtype=jnp.float32)

    # label one-hot with ignore_index=0 folded in, lane-packed with the teacher logits
    labels = label_seqs.reshape(-1)
    onehot_masked = (jax.nn.one_hot(labels, PAD32, dtype=jnp.float32)
                     * (labels != 0).astype(jnp.float32)[:, None])
    tout_pad = jnp.pad(teacher_out.reshape(N_TOK, NUM_CLASS).astype(jnp.float32),
                       ((0, 0), (0, PAD32 - NUM_CLASS)))
    lab_slab = jnp.concatenate([onehot_masked, tout_pad], axis=1)               # (N_TOK, 64)

    # teacher embedding + per-layer hiddens, lane-dense
    teach_slab = jnp.concatenate(
        [teacher_emb.reshape(N_TOK, T_HIDDEN).astype(jnp.float32)]
        + [t.reshape(N_TOK, T_HIDDEN).astype(jnp.float32) for t in teacher_hidden],
        axis=1)                                                                 # (N_TOK, 128)

    ce, mse, kdh, kdl = fused_student_search(
        alpha_flat, x_onehot, params["emb_pad"], params["w_slab"], lab_slab, teach_slab)

    loss_task = ce[0, 0]
    loss_distill = (mse[0, 0], kdh[0, 0], kdl[0, 0])   # (embedding, hidden, logits)
    loss_complexity = compute_loss_model_efficiency(alpha_flat)
    return loss_task, loss_distill, loss_complexity


# --------------------------------------------------------------------------- deterministic parameter init
def init_params(key):
    keys = jax.random.split(key, 16)
    emb = 0.02 * jax.random.normal(keys[0], (VOCAB, C), jnp.float32)
    emb_pad = jnp.pad(emb, ((0, VOCAB_PAD - VOCAB), (0, 0)))                    # (VOCAB_PAD, C)

    w_align_emb = 0.1 * jax.random.normal(keys[1], (C, T_HIDDEN), jnp.float32)
    w_out = 0.1 * jax.random.normal(keys[2], (C, NUM_CLASS), jnp.float32)
    w_align = [0.1 * jax.random.normal(keys[3 + c], (C, T_HIDDEN), jnp.float32)
               for c in range(NUM_CELLS)]

    kidx = 3 + NUM_CELLS
    w_cell = []    # [cell][edge] in the kernel's (n0,e0), (n1,e0), (n1,e1) order
    for c in range(NUM_CELLS):
        edges = []
        for node in range(NUM_NODE):
            for e in range(node + 1):
                k = jax.random.fold_in(keys[kidx], c * 100 + node * 10 + e)
                edges.append(0.1 * jax.random.normal(k, (C, C), jnp.float32))
        w_cell.append(edges)

    # Lane-dense weight mega-slab, columns grouped by the matmul LHS that consumes them:
    #   cell c : [align(cell input) | w(n0,e0) | w(n1,e0)]  then  [w(n1,e1)]
    #   tail   : [align(last cell output) | w_out padded to 32 lanes]
    # ("align(cell input)" of cell 0 is the embedding-alignment projection.)
    w_out_pad = jnp.pad(w_out, ((0, 0), (0, PAD32 - NUM_CLASS)))
    cols = []
    for c in range(NUM_CELLS):
        head_align = w_align_emb if c == 0 else w_align[c - 1]
        cols += [head_align, w_cell[c][0], w_cell[c][1], w_cell[c][2]]
    cols += [w_align[NUM_CELLS - 1], w_out_pad]
    w_slab = jnp.concatenate(cols, axis=1)
    assert w_slab.shape == (C, W_TOTAL)

    alpha_arch = []
    for layer in range(1, 1 + NUM_NODE):
        k = jax.random.fold_in(keys[kidx + 1], layer)
        alpha_arch.append(0.01 * jax.random.normal(k, (layer, NUM_OPS), jnp.float32))

    params = {"emb_pad": emb_pad, "w_slab": w_slab}
    return params, alpha_arch


# --------------------------------------------------------------------------- main
if __name__ == "__main__":
    root = jax.random.PRNGKey(0)
    k_param, k_in, k_lab, k_temb, k_thid, k_tout, k_gumbel = jax.random.split(root, 7)

    params, alpha_arch = init_params(k_param)

    input_seqs = jax.random.randint(k_in, (B, L), 1, VOCAB, dtype=jnp.int32)
    label_seqs = jax.random.randint(k_lab, (B, L), 0, NUM_CLASS, dtype=jnp.int32)
    label_seqs = label_seqs.at[0, 0].set(1)      # guarantee at least one non-ignored label

    teacher_emb = jax.random.normal(k_temb, (B, L, T_HIDDEN), jnp.float32)
    teacher_hidden = [jax.random.normal(jax.random.fold_in(k_thid, j),
                                        (B, L, T_HIDDEN), jnp.float32)
                      for j in range(TEACHER_LAYERS)]
    teacher_out = jax.random.normal(k_tout, (B, L, NUM_CLASS), jnp.float32)

    fwd = jax.jit(student_search_forward)
    loss_task, (loss_emb, loss_hidden, loss_logits), loss_complexity = fwd(
        params, alpha_arch, input_seqs, label_seqs,
        teacher_emb, teacher_hidden, teacher_out, k_gumbel)

    results = jax.block_until_ready(
        (loss_task, loss_emb, loss_hidden, loss_logits, loss_complexity))
    for r in results:
        assert jnp.isfinite(r), "non-finite loss"
    print("KERNEL_OK")
</pallas_src>

<mosaic_0001>
module attributes {stable_mosaic.version = 11 : i64} {
  func.func @_student_search_kernel(%arg0: i32, %arg1: memref<12xf32, #tpu.memory_space<smem>>, %arg2: memref<16x16xf32, #tpu.memory_space<vmem>>, %arg3: memref<16x32xf32, #tpu.memory_space<vmem>>, %arg4: memref<32x320xf32, #tpu.memory_space<vmem>>, %arg5: memref<16x64xf32, #tpu.memory_space<vmem>>, %arg6: memref<16x128xf32, #tpu.memory_space<vmem>>, %arg7: memref<1x1xf32, #tpu.memory_space<vmem>>, %arg8: memref<1x1xf32, #tpu.memory_space<vmem>>, %arg9: memref<1x1xf32, #tpu.memory_space<vmem>>, %arg10: memref<1x1xf32, #tpu.memory_space<vmem>>) attributes {dimension_semantics = [#tpu.dimension_semantics<arbitrary>], iteration_bounds = array<i64: 1>, scalar_prefetch = 0 : i64, scratch_operands = 0 : i64, tpu.core_type = #tpu.core_type<tc>, window_params = [{transform_indices = @transform_0, window_bounds = array<i64: 12>}, {pipeline_mode = #tpu.pipeline_mode<synchronous>, transform_indices = @transform_1, window_bounds = array<i64: 16, 16>}, {pipeline_mode = #tpu.pipeline_mode<synchronous>, transform_indices = @transform_2, window_bounds = array<i64: 16, 32>}, {pipeline_mode = #tpu.pipeline_mode<synchronous>, transform_indices = @transform_3, window_bounds = array<i64: 32, 320>}, {pipeline_mode = #tpu.pipeline_mode<synchronous>, transform_indices = @transform_4, window_bounds = array<i64: 16, 64>}, {pipeline_mode = #tpu.pipeline_mode<synchronous>, transform_indices = @transform_5, window_bounds = array<i64: 16, 128>}, {pipeline_mode = #tpu.pipeline_mode<synchronous>, transform_indices = @transform_6, window_bounds = array<i64: 1, 1>}, {pipeline_mode = #tpu.pipeline_mode<synchronous>, transform_indices = @transform_7, window_bounds = array<i64: 1, 1>}, {pipeline_mode = #tpu.pipeline_mode<synchronous>, transform_indices = @transform_8, window_bounds = array<i64: 1, 1>}, {pipeline_mode = #tpu.pipeline_mode<synchronous>, transform_indices = @transform_9, window_bounds = array<i64: 1, 1>}]} {
    %c0 = arith.constant 0 : index
    %c0_0 = arith.constant 0 : index
    %0 = vector.load %arg4[%c0, %c0_0] : memref<32x320xf32, #tpu.memory_space<vmem>>, vector<32x320xf32>
    %c0_1 = arith.constant 0 : index
    %c0_2 = arith.constant 0 : index
    %1 = vector.load %arg2[%c0_1, %c0_2] : memref<16x16xf32, #tpu.memory_space<vmem>>, vector<16x16xf32>
    %c0_3 = arith.constant 0 : index
    %c0_4 = arith.constant 0 : index
    %2 = vector.load %arg3[%c0_3, %c0_4] : memref<16x32xf32, #tpu.memory_space<vmem>>, vector<16x32xf32>
    %cst = arith.constant dense<0.000000e+00> : vector<16x32xf32>
    %3 = tpu.matmul %1, %2, %cst {dimension_numbers = #tpu.dot_dimension_numbers<[1], [0], [0], [1], [0, 0, 1, 1], [], []>} : vector<16x16xf32>, vector<16x32xf32>, vector<16x32xf32> -> vector<16x32xf32>
    %c1 = arith.constant 1 : index
    %4 = memref.load %arg1[%c1] : memref<12xf32, #tpu.memory_space<smem>>
    %c5 = arith.constant 5 : index
    %5 = memref.load %arg1[%c5] : memref<12xf32, #tpu.memory_space<smem>>
    %c9 = arith.constant 9 : index
    %6 = memref.load %arg1[%c9] : memref<12xf32, #tpu.memory_space<smem>>
    %c2 = arith.constant 2 : index
    %7 = memref.load %arg1[%c2] : memref<12xf32, #tpu.memory_space<smem>>
    %c6 = arith.constant 6 : index
    %8 = memref.load %arg1[%c6] : memref<12xf32, #tpu.memory_space<smem>>
    %c10 = arith.constant 10 : index
    %9 = memref.load %arg1[%c10] : memref<12xf32, #tpu.memory_space<smem>>
    %c3 = arith.constant 3 : index
    %10 = memref.load %arg1[%c3] : memref<12xf32, #tpu.memory_space<smem>>
    %c7 = arith.constant 7 : index
    %11 = memref.load %arg1[%c7] : memref<12xf32, #tpu.memory_space<smem>>
    %c11 = arith.constant 11 : index
    %12 = memref.load %arg1[%c11] : memref<12xf32, #tpu.memory_space<smem>>
    %13 = vector.extract_strided_slice %0 {offsets = [0, 0], sizes = [32, 96], strides = [1, 1]} : vector<32x320xf32> to vector<32x96xf32>
    %cst_5 = arith.constant dense<0.000000e+00> : vector<16x96xf32>
    %14 = tpu.matmul %3, %13, %cst_5 {dimension_numbers = #tpu.dot_dimension_numbers<[1], [0], [0], [1], [0, 0, 1, 1], [], []>} : vector<16x32xf32>, vector<32x96xf32>, vector<16x96xf32> -> vector<16x96xf32>
    %15 = vector.extract_strided_slice %14 {offsets = [0, 0], sizes = [16, 32], strides = [1, 1]} : vector<16x96xf32> to vector<16x32xf32>
    %16 = vector.extract_strided_slice %14 {offsets = [0, 32], sizes = [16, 32], strides = [1, 1]} : vector<16x96xf32> to vector<16x32xf32>
    %17 = vector.extract_strided_slice %14 {offsets = [0, 64], sizes = [16, 32], strides = [1, 1]} : vector<16x96xf32> to vector<16x32xf32>
    %18 = vector.broadcast %4 : f32 to vector<16x32xf32>
    %19 = arith.mulf %18, %3 : vector<16x32xf32>
    %20 = vector.broadcast %7 : f32 to vector<16x32xf32>
    %21 = arith.mulf %20, %16 : vector<16x32xf32>
    %22 = arith.addf %19, %21 : vector<16x32xf32>
    %cst_6 = arith.constant 0.000000e+00 : f32
    %23 = vector.broadcast %cst_6 : f32 to vector<16x32xf32>
    %24 = arith.maximumf %16, %23 : vector<16x32xf32>
    %25 = vector.broadcast %10 : f32 to vector<16x32xf32>
    %26 = arith.mulf %25, %24 : vector<16x32xf32>
    %27 = arith.addf %22, %26 : vector<16x32xf32>
    %28 = vector.extract_strided_slice %0 {offsets = [0, 96], sizes = [32, 32], strides = [1, 1]} : vector<32x320xf32> to vector<32x32xf32>
    %cst_7 = arith.constant dense<0.000000e+00> : vector<16x32xf32>
    %29 = tpu.matmul %27, %28, %cst_7 {dimension_numbers = #tpu.dot_dimension_numbers<[1], [0], [0], [1], [0, 0, 1, 1], [], []>} : vector<16x32xf32>, vector<32x32xf32>, vector<16x32xf32> -> vector<16x32xf32>
    %30 = vector.broadcast %5 : f32 to vector<16x32xf32>
    %31 = arith.mulf %30, %3 : vector<16x32xf32>
    %32 = vector.broadcast %8 : f32 to vector<16x32xf32>
    %33 = arith.mulf %32, %17 : vector<16x32xf32>
    %34 = arith.addf %31, %33 : vector<16x32xf32>
    %cst_8 = arith.constant 0.000000e+00 : f32
    %35 = vector.broadcast %cst_8 : f32 to vector<16x32xf32>
    %36 = arith.maximumf %17, %35 : vector<16x32xf32>
    %37 = vector.broadcast %11 : f32 to vector<16x32xf32>
    %38 = arith.mulf %37, %36 : vector<16x32xf32>
    %39 = arith.addf %34, %38 : vector<16x32xf32>
    %40 = vector.broadcast %6 : f32 to vector<16x32xf32>
    %41 = arith.mulf %40, %27 : vector<16x32xf32>
    %42 = arith.addf %39, %41 : vector<16x32xf32>
    %43 = vector.broadcast %9 : f32 to vector<16x32xf32>
    %44 = arith.mulf %43, %29 : vector<16x32xf32>
    %45 = arith.addf %42, %44 : vector<16x32xf32>
    %cst_9 = arith.constant 0.000000e+00 : f32
    %46 = vector.broadcast %cst_9 : f32 to vector<16x32xf32>
    %47 = arith.maximumf %29, %46 : vector<16x32xf32>
    %48 = vector.broadcast %12 : f32 to vector<16x32xf32>
    %49 = arith.mulf %48, %47 : vector<16x32xf32>
    %50 = arith.addf %45, %49 : vector<16x32xf32>
    %51 = vector.extract_strided_slice %0 {offsets = [0, 128], sizes = [32, 96], strides = [1, 1]} : vector<32x320xf32> to vector<32x96xf32>
    %cst_10 = arith.constant dense<0.000000e+00> : vector<16x96xf32>
    %52 = tpu.matmul %50, %51, %cst_10 {dimension_numbers = #tpu.dot_dimension_numbers<[1], [0], [0], [1], [0, 0, 1, 1], [], []>} : vector<16x32xf32>, vector<32x96xf32>, vector<16x96xf32> -> vector<16x96xf32>
    %53 = vector.extract_strided_slice %52 {offsets = [0, 0], sizes = [16, 32], strides = [1, 1]} : vector<16x96xf32> to vector<16x32xf32>
    %54 = vector.extract_strided_slice %52 {offsets = [0, 32], sizes = [16, 32], strides = [1, 1]} : vector<16x96xf32> to vector<16x32xf32>
    %55 = vector.extract_strided_slice %52 {offsets = [0, 64], sizes = [16, 32], strides = [1, 1]} : vector<16x96xf32> to vector<16x32xf32>
    %56 = vector.broadcast %4 : f32 to vector<16x32xf32>
    %57 = arith.mulf %56, %50 : vector<16x32xf32>
    %58 = vector.broadcast %7 : f32 to vector<16x32xf32>
    %59 = arith.mulf %58, %54 : vector<16x32xf32>
    %60 = arith.addf %57, %59 : vector<16x32xf32>
    %cst_11 = arith.constant 0.000000e+00 : f32
    %61 = vector.broadcast %cst_11 : f32 to vector<16x32xf32>
    %62 = arith.maximumf %54, %61 : vector<16x32xf32>
    %63 = vector.broadcast %10 : f32 to vector<16x32xf32>
    %64 = arith.mulf %63, %62 : vector<16x32xf32>
    %65 = arith.addf %60, %64 : vector<16x32xf32>
    %66 = vector.extract_strided_slice %0 {offsets = [0, 224], sizes = [32, 32], strides = [1, 1]} : vector<32x320xf32> to vector<32x32xf32>
    %cst_12 = arith.constant dense<0.000000e+00> : vector<16x32xf32>
    %67 = tpu.matmul %65, %66, %cst_12 {dimension_numbers = #tpu.dot_dimension_numbers<[1], [0], [0], [1], [0, 0, 1, 1], [], []>} : vector<16x32xf32>, vector<32x32xf32>, vector<16x32xf32> -> vector<16x32xf32>
    %68 = vector.broadcast %5 : f32 to vector<16x32xf32>
    %69 = arith.mulf %68, %50 : vector<16x32xf32>
    %70 = vector.broadcast %8 : f32 to vector<16x32xf32>
    %71 = arith.mulf %70, %55 : vector<16x32xf32>
    %72 = arith.addf %69, %71 : vector<16x32xf32>
    %cst_13 = arith.constant 0.000000e+00 : f32
    %73 = vector.broadcast %cst_13 : f32 to vector<16x32xf32>
    %74 = arith.maximumf %55, %73 : vector<16x32xf32>
    %75 = vector.broadcast %11 : f32 to vector<16x32xf32>
    %76 = arith.mulf %75, %74 : vector<16x32xf32>
    %77 = arith.addf %72, %76 : vector<16x32xf32>
    %78 = vector.broadcast %6 : f32 to vector<16x32xf32>
    %79 = arith.mulf %78, %65 : vector<16x32xf32>
    %80 = arith.addf %77, %79 : vector<16x32xf32>
    %81 = vector.broadcast %9 : f32 to vector<16x32xf32>
    %82 = arith.mulf %81, %67 : vector<16x32xf32>
    %83 = arith.addf %80, %82 : vector<16x32xf32>
    %cst_14 = arith.constant 0.000000e+00 : f32
    %84 = vector.broadcast %cst_14 : f32 to vector<16x32xf32>
    %85 = arith.maximumf %67, %84 : vector<16x32xf32>
    %86 = vector.broadcast %12 : f32 to vector<16x32xf32>
    %87 = arith.mulf %86, %85 : vector<16x32xf32>
    %88 = arith.addf %83, %87 : vector<16x32xf32>
    %89 = vector.extract_strided_slice %0 {offsets = [0, 256], sizes = [32, 64], strides = [1, 1]} : vector<32x320xf32> to vector<32x64xf32>
    %cst_15 = arith.constant dense<0.000000e+00> : vector<16x64xf32>
    %90 = tpu.matmul %88, %89, %cst_15 {dimension_numbers = #tpu.dot_dimension_numbers<[1], [0], [0], [1], [0, 0, 1, 1], [], []>} : vector<16x32xf32>, vector<32x64xf32>, vector<16x64xf32> -> vector<16x64xf32>
    %91 = vector.extract_strided_slice %90 {offsets = [0, 0], sizes = [16, 32], strides = [1, 1]} : vector<16x64xf32> to vector<16x32xf32>
    %92 = vector.extract_strided_slice %90 {offsets = [0, 32], sizes = [16, 11], strides = [1, 1]} : vector<16x64xf32> to vector<16x11xf32>
    %c0_16 = arith.constant 0 : index
    %c0_17 = arith.constant 0 : index
    %93 = vector.load %arg5[%c0_16, %c0_17] : memref<16x64xf32, #tpu.memory_space<vmem>>, vector<16x64xf32>
    %c0_18 = arith.constant 0 : index
    %c0_19 = arith.constant 0 : index
    %94 = vector.load %arg6[%c0_18, %c0_19] : memref<16x128xf32, #tpu.memory_space<vmem>>, vector<16x128xf32>
    %95 = vector.extract_strided_slice %93 {offsets = [0, 0], sizes = [16, 11], strides = [1, 1]} : vector<16x64xf32> to vector<16x11xf32>
    %96 = vector.extract_strided_slice %93 {offsets = [0, 32], sizes = [16, 11], strides = [1, 1]} : vector<16x64xf32> to vector<16x11xf32>
    %cst_20 = arith.constant dense<0xFF800000> : vector<16xf32>
    %97 = vector.multi_reduction <maximumf>, %92, %cst_20 [1] : vector<16x11xf32> to vector<16xf32>
    %98 = vector.shape_cast %97 : vector<16xf32> to vector<16x1xf32>
    %99 = vector.broadcast %98 : vector<16x1xf32> to vector<16x11xf32>
    %100 = arith.subf %92, %99 : vector<16x11xf32>
    %101 = math.exp %100 : vector<16x11xf32>
    %cst_21 = arith.constant dense<0.000000e+00> : vector<16xf32>
    %102 = vector.multi_reduction <add>, %101, %cst_21 [1] : vector<16x11xf32> to vector<16xf32>
    %103 = vector.shape_cast %102 : vector<16xf32> to vector<16x1xf32>
    %104 = math.log %103 : vector<16x1xf32>
    %105 = arith.addf %98, %104 : vector<16x1xf32>
    %cst_22 = arith.constant dense<0.000000e+00> : vector<16xf32>
    %106 = vector.multi_reduction <add>, %95, %cst_22 [1] : vector<16x11xf32> to vector<16xf32>
    %107 = vector.shape_cast %106 : vector<16xf32> to vector<16x1xf32>
    %108 = arith.mulf %107, %105 : vector<16x1xf32>
    %cst_23 = arith.constant dense<0.000000e+00> : vector<16xf32>
    %109 = vector.multi_reduction <add>, %108, %cst_23 [1] : vector<16x1xf32> to vector<16xf32>
    %110 = vector.shape_cast %109 : vector<16xf32> to vector<16x1xf32>
    %cst_24 = arith.constant dense<0.000000e+00> : vector<1xf32>
    %111 = vector.multi_reduction <add>, %110, %cst_24 [0] : vector<16x1xf32> to vector<1xf32>
    %112 = vector.shape_cast %111 : vector<1xf32> to vector<1x1xf32>
    %113 = arith.mulf %95, %92 : vector<16x11xf32>
    %cst_25 = arith.constant dense<0.000000e+00> : vector<16xf32>
    %114 = vector.multi_reduction <add>, %113, %cst_25 [1] : vector<16x11xf32> to vector<16xf32>
    %115 = vector.shape_cast %114 : vector<16xf32> to vector<16x1xf32>
    %cst_26 = arith.constant dense<0.000000e+00> : vector<1xf32>
    %116 = vector.multi_reduction <add>, %115, %cst_26 [0] : vector<16x1xf32> to vector<1xf32>
    %117 = vector.shape_cast %116 : vector<1xf32> to vector<1x1xf32>
    %118 = arith.subf %112, %117 : vector<1x1xf32>
    %cst_27 = arith.constant dense<0.000000e+00> : vector<16xf32>
    %119 = vector.multi_reduction <add>, %107, %cst_27 [1] : vector<16x1xf32> to vector<16xf32>
    %120 = vector.shape_cast %119 : vector<16xf32> to vector<16x1xf32>
    %cst_28 = arith.constant dense<0.000000e+00> : vector<1xf32>
    %121 = vector.multi_reduction <add>, %120, %cst_28 [0] : vector<16x1xf32> to vector<1xf32>
    %122 = vector.shape_cast %121 : vector<1xf32> to vector<1x1xf32>
    %cst_29 = arith.constant 1.000000e+00 : f32
    %123 = vector.broadcast %cst_29 : f32 to vector<1x1xf32>
    %124 = arith.maximumf %122, %123 : vector<1x1xf32>
    %125 = arith.divf %118, %124 : vector<1x1xf32>
    %c0_30 = arith.constant 0 : index
    %c0_31 = arith.constant 0 : index
    %126 = vector.load %arg7[%c0_30, %c0_31] : memref<1x1xf32, #tpu.memory_space<vmem>>, vector<1x1xf32>
    tpu.vector_store %arg7[%c0_30, %c0_31], %125 {strides = array<i32>} : memref<1x1xf32, #tpu.memory_space<vmem>>, vector<1x1xf32>,
    %127 = vector.extract_strided_slice %94 {offsets = [0, 0], sizes = [16, 32], strides = [1, 1]} : vector<16x128xf32> to vector<16x32xf32>
    %128 = arith.subf %15, %127 : vector<16x32xf32>
    %129 = arith.mulf %128, %128 : vector<16x32xf32>
    %cst_32 = arith.constant dense<0.000000e+00> : vector<16xf32>
    %130 = vector.multi_reduction <add>, %129, %cst_32 [1] : vector<16x32xf32> to vector<16xf32>
    %131 = vector.shape_cast %130 : vector<16xf32> to vector<16x1xf32>
    %cst_33 = arith.constant dense<0.000000e+00> : vector<1xf32>
    %132 = vector.multi_reduction <add>, %131, %cst_33 [0] : vector<16x1xf32> to vector<1xf32>
    %133 = vector.shape_cast %132 : vector<1xf32> to vector<1x1xf32>
    %cst_34 = arith.constant 0.001953125 : f32
    %134 = vector.broadcast %cst_34 : f32 to vector<1x1xf32>
    %135 = arith.mulf %133, %134 : vector<1x1xf32>
    %c0_35 = arith.constant 0 : index
    %c0_36 = arith.constant 0 : index
    %136 = vector.load %arg8[%c0_35, %c0_36] : memref<1x1xf32, #tpu.memory_space<vmem>>, vector<1x1xf32>
    tpu.vector_store %arg8[%c0_35, %c0_36], %135 {strides = array<i32>} : memref<1x1xf32, #tpu.memory_space<vmem>>, vector<1x1xf32>,
    %cst_37 = arith.constant 1.000000e+00 : f32
    %137 = vector.broadcast %cst_37 : f32 to vector<16x32xf32>
    %138 = arith.mulf %53, %137 : vector<16x32xf32>
    %cst_38 = arith.constant dense<0xFF800000> : vector<16xf32>
    %139 = vector.multi_reduction <maximumf>, %138, %cst_38 [1] : vector<16x32xf32> to vector<16xf32>
    %140 = vector.shape_cast %139 : vector<16xf32> to vector<16x1xf32>
    %141 = vector.broadcast %140 : vector<16x1xf32> to vector<16x32xf32>
    %142 = arith.subf %138, %141 : vector<16x32xf32>
    %143 = math.exp %142 : vector<16x32xf32>
    %cst_39 = arith.constant dense<0.000000e+00> : vector<16xf32>
    %144 = vector.multi_reduction <add>, %143, %cst_39 [1] : vector<16x32xf32> to vector<16xf32>
    %145 = vector.shape_cast %144 : vector<16xf32> to vector<16x1xf32>
    %146 = vector.broadcast %140 : vector<16x1xf32> to vector<16x32xf32>
    %147 = arith.subf %138, %146 : vector<16x32xf32>
    %148 = math.log %145 : vector<16x1xf32>
    %149 = vector.broadcast %148 : vector<16x1xf32> to vector<16x32xf32>
    %150 = arith.subf %147, %149 : vector<16x32xf32>
    %151 = tpu.reciprocal %145 {approx = true} : vector<16x1xf32> -> vector<16x1xf32>
    %152 = vector.broadcast %151 : vector<16x1xf32> to vector<16x32xf32>
    %153 = arith.mulf %143, %152 : vector<16x32xf32>
    %cst_40 = arith.constant 1.000000e+00 : f32
    %154 = vector.broadcast %cst_40 : f32 to vector<16x32xf32>
    %155 = arith.mulf %91, %154 : vector<16x32xf32>
    %cst_41 = arith.constant dense<0xFF800000> : vector<16xf32>
    %156 = vector.multi_reduction <maximumf>, %155, %cst_41 [1] : vector<16x32xf32> to vector<16xf32>
    %157 = vector.shape_cast %156 : vector<16xf32> to vector<16x1xf32>
    %158 = vector.broadcast %157 : vector<16x1xf32> to vector<16x32xf32>
    %159 = arith.subf %155, %158 : vector<16x32xf32>
    %160 = math.exp %159 : vector<16x32xf32>
    %cst_42 = arith.constant dense<0.000000e+00> : vector<16xf32>
    %161 = vector.multi_reduction <add>, %160, %cst_42 [1] : vector<16x32xf32> to vector<16xf32>
    %162 = vector.shape_cast %161 : vector<16xf32> to vector<16x1xf32>
    %163 = vector.broadcast %157 : vector<16x1xf32> to vector<16x32xf32>
    %164 = arith.subf %155, %163 : vector<16x32xf32>
    %165 = math.log %162 : vector<16x1xf32>
    %166 = vector.broadcast %165 : vector<16x1xf32> to vector<16x32xf32>
    %167 = arith.subf %164, %166 : vector<16x32xf32>
    %168 = tpu.reciprocal %162 {approx = true} : vector<16x1xf32> -> vector<16x1xf32>
    %169 = vector.broadcast %168 : vector<16x1xf32> to vector<16x32xf32>
    %170 = arith.mulf %160, %169 : vector<16x32xf32>
    %171 = vector.extract_strided_slice %94 {offsets = [0, 32], sizes = [16, 32], strides = [1, 1]} : vector<16x128xf32> to vector<16x32xf32>
    %cst_43 = arith.constant 1.000000e+00 : f32
    %172 = vector.broadcast %cst_43 : f32 to vector<16x32xf32>
    %173 = arith.mulf %171, %172 : vector<16x32xf32>
    %cst_44 = arith.constant dense<0xFF800000> : vector<16xf32>
    %174 = vector.multi_reduction <maximumf>, %173, %cst_44 [1] : vector<16x32xf32> to vector<16xf32>
    %175 = vector.shape_cast %174 : vector<16xf32> to vector<16x1xf32>
    %176 = vector.broadcast %175 : vector<16x1xf32> to vector<16x32xf32>
    %177 = arith.subf %173, %176 : vector<16x32xf32>
    %178 = vector.broadcast %175 : vector<16x1xf32> to vector<16x32xf32>
    %179 = arith.subf %173, %178 : vector<16x32xf32>
    %180 = math.exp %179 : vector<16x32xf32>
    %cst_45 = arith.constant dense<0.000000e+00> : vector<16xf32>
    %181 = vector.multi_reduction <add>, %180, %cst_45 [1] : vector<16x32xf32> to vector<16xf32>
    %182 = vector.shape_cast %181 : vector<16xf32> to vector<16x1xf32>
    %183 = math.log %182 : vector<16x1xf32>
    %184 = vector.broadcast %183 : vector<16x1xf32> to vector<16x32xf32>
    %185 = arith.subf %177, %184 : vector<16x32xf32>
    %186 = vector.extract_strided_slice %94 {offsets = [0, 64], sizes = [16, 32], strides = [1, 1]} : vector<16x128xf32> to vector<16x32xf32>
    %cst_46 = arith.constant 1.000000e+00 : f32
    %187 = vector.broadcast %cst_46 : f32 to vector<16x32xf32>
    %188 = arith.mulf %186, %187 : vector<16x32xf32>
    %cst_47 = arith.constant dense<0xFF800000> : vector<16xf32>
    %189 = vector.multi_reduction <maximumf>, %188, %cst_47 [1] : vector<16x32xf32> to vector<16xf32>
    %190 = vector.shape_cast %189 : vector<16xf32> to vector<16x1xf32>
    %191 = vector.broadcast %190 : vector<16x1xf32> to vector<16x32xf32>
    %192 = arith.subf %188, %191 : vector<16x32xf32>
    %193 = vector.broadcast %190 : vector<16x1xf32> to vector<16x32xf32>
    %194 = arith.subf %188, %193 : vector<16x32xf32>
    %195 = math.exp %194 : vector<16x32xf32>
    %cst_48 = arith.constant dense<0.000000e+00> : vector<16xf32>
    %196 = vector.multi_reduction <add>, %195, %cst_48 [1] : vector<16x32xf32> to vector<16xf32>
    %197 = vector.shape_cast %196 : vector<16xf32> to vector<16x1xf32>
    %198 = math.log %197 : vector<16x1xf32>
    %199 = vector.broadcast %198 : vector<16x1xf32> to vector<16x32xf32>
    %200 = arith.subf %192, %199 : vector<16x32xf32>
    %201 = vector.extract_strided_slice %94 {offsets = [0, 96], sizes = [16, 32], strides = [1, 1]} : vector<16x128xf32> to vector<16x32xf32>
    %cst_49 = arith.constant 1.000000e+00 : f32
    %202 = vector.broadcast %cst_49 : f32 to vector<16x32xf32>
    %203 = arith.mulf %201, %202 : vector<16x32xf32>
    %cst_50 = arith.constant dense<0xFF800000> : vector<16xf32>
    %204 = vector.multi_reduction <maximumf>, %203, %cst_50 [1] : vector<16x32xf32> to vector<16xf32>
    %205 = vector.shape_cast %204 : vector<16xf32> to vector<16x1xf32>
    %206 = vector.broadcast %205 : vector<16x1xf32> to vector<16x32xf32>
    %207 = arith.subf %203, %206 : vector<16x32xf32>
    %208 = vector.broadcast %205 : vector<16x1xf32> to vector<16x32xf32>
    %209 = arith.subf %203, %208 : vector<16x32xf32>
    %210 = math.exp %209 : vector<16x32xf32>
    %cst_51 = arith.constant dense<0.000000e+00> : vector<16xf32>
    %211 = vector.multi_reduction <add>, %210, %cst_51 [1] : vector<16x32xf32> to vector<16xf32>
    %212 = vector.shape_cast %211 : vector<16xf32> to vector<16x1xf32>
    %213 = math.log %212 : vector<16x1xf32>
    %214 = vector.broadcast %213 : vector<16x1xf32> to vector<16x32xf32>
    %215 = arith.subf %207, %214 : vector<16x32xf32>
    %cst_52 = arith.constant 0.000000e+00 : f32
    %216 = vector.broadcast %cst_52 : f32 to vector<1x1xf32>
    %217 = arith.subf %150, %185 : vector<16x32xf32>
    %218 = arith.mulf %153, %217 : vector<16x32xf32>
    %cst_53 = arith.constant dense<0.000000e+00> : vector<16xf32>
    %219 = vector.multi_reduction <add>, %218, %cst_53 [1] : vector<16x32xf32> to vector<16xf32>
    %220 = vector.shape_cast %219 : vector<16xf32> to vector<16x1xf32>
    %cst_54 = arith.constant dense<0.000000e+00> : vector<1xf32>
    %221 = vector.multi_reduction <add>, %220, %cst_54 [0] : vector<16x1xf32> to vector<1xf32>
    %222 = vector.shape_cast %221 : vector<1xf32> to vector<1x1xf32>
    %223 = arith.addf %216, %222 : vector<1x1xf32>
    %224 = arith.subf %150, %200 : vector<16x32xf32>
    %225 = arith.mulf %153, %224 : vector<16x32xf32>
    %cst_55 = arith.constant dense<0.000000e+00> : vector<16xf32>
    %226 = vector.multi_reduction <add>, %225, %cst_55 [1] : vector<16x32xf32> to vector<16xf32>
    %227 = vector.shape_cast %226 : vector<16xf32> to vector<16x1xf32>
    %cst_56 = arith.constant dense<0.000000e+00> : vector<1xf32>
    %228 = vector.multi_reduction <add>, %227, %cst_56 [0] : vector<16x1xf32> to vector<1xf32>
    %229 = vector.shape_cast %228 : vector<1xf32> to vector<1x1xf32>
    %230 = arith.addf %223, %229 : vector<1x1xf32>
    %231 = arith.subf %150, %215 : vector<16x32xf32>
    %232 = arith.mulf %153, %231 : vector<16x32xf32>
    %cst_57 = arith.constant dense<0.000000e+00> : vector<16xf32>
    %233 = vector.multi_reduction <add>, %232, %cst_57 [1] : vector<16x32xf32> to vector<16xf32>
    %234 = vector.shape_cast %233 : vector<16xf32> to vector<16x1xf32>
    %cst_58 = arith.constant dense<0.000000e+00> : vector<1xf32>
    %235 = vector.multi_reduction <add>, %234, %cst_58 [0] : vector<16x1xf32> to vector<1xf32>
    %236 = vector.shape_cast %235 : vector<1xf32> to vector<1x1xf32>
    %237 = arith.addf %230, %236 : vector<1x1xf32>
    %238 = arith.subf %167, %185 : vector<16x32xf32>
    %239 = arith.mulf %170, %238 : vector<16x32xf32>
    %cst_59 = arith.constant dense<0.000000e+00> : vector<16xf32>
    %240 = vector.multi_reduction <add>, %239, %cst_59 [1] : vector<16x32xf32> to vector<16xf32>
    %241 = vector.shape_cast %240 : vector<16xf32> to vector<16x1xf32>
    %cst_60 = arith.constant dense<0.000000e+00> : vector<1xf32>
    %242 = vector.multi_reduction <add>, %241, %cst_60 [0] : vector<16x1xf32> to vector<1xf32>
    %243 = vector.shape_cast %242 : vector<1xf32> to vector<1x1xf32>
    %244 = arith.addf %237, %243 : vector<1x1xf32>
    %245 = arith.subf %167, %200 : vector<16x32xf32>
    %246 = arith.mulf %170, %245 : vector<16x32xf32>
    %cst_61 = arith.constant dense<0.000000e+00> : vector<16xf32>
    %247 = vector.multi_reduction <add>, %246, %cst_61 [1] : vector<16x32xf32> to vector<16xf32>
    %248 = vector.shape_cast %247 : vector<16xf32> to vector<16x1xf32>
    %cst_62 = arith.constant dense<0.000000e+00> : vector<1xf32>
    %249 = vector.multi_reduction <add>, %248, %cst_62 [0] : vector<16x1xf32> to vector<1xf32>
    %250 = vector.shape_cast %249 : vector<1xf32> to vector<1x1xf32>
    %251 = arith.addf %244, %250 : vector<1x1xf32>
    %252 = arith.subf %167, %215 : vector<16x32xf32>
    %253 = arith.mulf %170, %252 : vector<16x32xf32>
    %cst_63 = arith.constant dense<0.000000e+00> : vector<16xf32>
    %254 = vector.multi_reduction <add>, %253, %cst_63 [1] : vector<16x32xf32> to vector<16xf32>
    %255 = vector.shape_cast %254 : vector<16xf32> to vector<16x1xf32>
    %cst_64 = arith.constant dense<0.000000e+00> : vector<1xf32>
    %256 = vector.multi_reduction <add>, %255, %cst_64 [0] : vector<16x1xf32> to vector<1xf32>
    %257 = vector.shape_cast %256 : vector<1xf32> to vector<1x1xf32>
    %258 = arith.addf %251, %257 : vector<1x1xf32>
    %cst_65 = arith.constant 0.0833333358 : f32
    %259 = vector.broadcast %cst_65 : f32 to vector<1x1xf32>
    %260 = arith.mulf %258, %259 : vector<1x1xf32>
    %c0_66 = arith.constant 0 : index
    %c0_67 = arith.constant 0 : index
    %261 = vector.load %arg9[%c0_66, %c0_67] : memref<1x1xf32, #tpu.memory_space<vmem>>, vector<1x1xf32>
    tpu.vector_store %arg9[%c0_66, %c0_67], %260 {strides = array<i32>} : memref<1x1xf32, #tpu.memory_space<vmem>>, vector<1x1xf32>,
    %cst_68 = arith.constant 1.000000e+00 : f32
    %262 = vector.broadcast %cst_68 : f32 to vector<16x11xf32>
    %263 = arith.mulf %92, %262 : vector<16x11xf32>
    %cst_69 = arith.constant dense<0xFF800000> : vector<16xf32>
    %264 = vector.multi_reduction <maximumf>, %263, %cst_69 [1] : vector<16x11xf32> to vector<16xf32>
    %265 = vector.shape_cast %264 : vector<16xf32> to vector<16x1xf32>
    %266 = vector.broadcast %265 : vector<16x1xf32> to vector<16x11xf32>
    %267 = arith.subf %263, %266 : vector<16x11xf32>
    %268 = math.exp %267 : vector<16x11xf32>
    %cst_70 = arith.constant dense<0.000000e+00> : vector<16xf32>
    %269 = vector.multi_reduction <add>, %268, %cst_70 [1] : vector<16x11xf32> to vector<16xf32>
    %270 = vector.shape_cast %269 : vector<16xf32> to vector<16x1xf32>
    %271 = vector.broadcast %265 : vector<16x1xf32> to vector<16x11xf32>
    %272 = arith.subf %263, %271 : vector<16x11xf32>
    %273 = math.log %270 : vector<16x1xf32>
    %274 = vector.broadcast %273 : vector<16x1xf32> to vector<16x11xf32>
    %275 = arith.subf %272, %274 : vector<16x11xf32>
    %276 = tpu.reciprocal %270 {approx = true} : vector<16x1xf32> -> vector<16x1xf32>
    %277 = vector.broadcast %276 : vector<16x1xf32> to vector<16x11xf32>
    %278 = arith.mulf %268, %277 : vector<16x11xf32>
    %cst_71 = arith.constant 1.000000e+00 : f32
    %279 = vector.broadcast %cst_71 : f32 to vector<16x11xf32>
    %280 = arith.mulf %96, %279 : vector<16x11xf32>
    %cst_72 = arith.constant dense<0xFF800000> : vector<16xf32>
    %281 = vector.multi_reduction <maximumf>, %280, %cst_72 [1] : vector<16x11xf32> to vector<16xf32>
    %282 = vector.shape_cast %281 : vector<16xf32> to vector<16x1xf32>
    %283 = vector.broadcast %282 : vector<16x1xf32> to vector<16x11xf32>
    %284 = arith.subf %280, %283 : vector<16x11xf32>
    %285 = vector.broadcast %282 : vector<16x1xf32> to vector<16x11xf32>
    %286 = arith.subf %280, %285 : vector<16x11xf32>
    %287 = math.exp %286 : vector<16x11xf32>
    %cst_73 = arith.constant dense<0.000000e+00> : vector<16xf32>
    %288 = vector.multi_reduction <add>, %287, %cst_73 [1] : vector<16x11xf32> to vector<16xf32>
    %289 = vector.shape_cast %288 : vector<16xf32> to vector<16x1xf32>
    %290 = math.log %289 : vector<16x1xf32>
    %291 = vector.broadcast %290 : vector<16x1xf32> to vector<16x11xf32>
    %292 = arith.subf %284, %291 : vector<16x11xf32>
    %293 = arith.subf %275, %292 : vector<16x11xf32>
    %294 = arith.mulf %278, %293 : vector<16x11xf32>
    %cst_74 = arith.constant dense<0.000000e+00> : vector<16xf32>
    %295 = vector.multi_reduction <add>, %294, %cst_74 [1] : vector<16x11xf32> to vector<16xf32>
    %296 = vector.shape_cast %295 : vector<16xf32> to vector<16x1xf32>
    %cst_75 = arith.constant dense<0.000000e+00> : vector<1xf32>
    %297 = vector.multi_reduction <add>, %296, %cst_75 [0] : vector<16x1xf32> to vector<1xf32>
    %298 = vector.shape_cast %297 : vector<1xf32> to vector<1x1xf32>
    %cst_76 = arith.constant 5.000000e-01 : f32
    %299 = vector.broadcast %cst_76 : f32 to vector<1x1xf32>
    %300 = arith.mulf %298, %299 : vector<1x1xf32>
    %c0_77 = arith.constant 0 : index
    %c0_78 = arith.constant 0 : index
    %301 = vector.load %arg10[%c0_77, %c0_78] : memref<1x1xf32, #tpu.memory_space<vmem>>, vector<1x1xf32>
    tpu.vector_store %arg10[%c0_77, %c0_78], %300 {strides = array<i32>} : memref<1x1xf32, #tpu.memory_space<vmem>>, vector<1x1xf32>,
    return
  }
  func.func @transform_0(%arg0: i32) -> i32 {
    %c0_i32 = arith.constant 0 : i32
    %c0_i32_0 = arith.constant 0 : i32
    return %c0_i32 : i32
  }
  func.func @transform_1(%arg0: i32) -> (i32, i32) {
    %c0_i32 = arith.constant 0 : i32
    %c0_i32_0 = arith.constant 0 : i32
    %c0_i32_1 = arith.constant 0 : i32
    return %c0_i32, %c0_i32_0 : i32, i32
  }
  func.func @transform_2(%arg0: i32) -> (i32, i32) {
    %c0_i32 = arith.constant 0 : i32
    %c0_i32_0 = arith.constant 0 : i32
    %c0_i32_1 = arith.constant 0 : i32
    return %c0_i32, %c0_i32_0 : i32, i32
  }
  func.func @transform_3(%arg0: i32) -> (i32, i32) {
    %c0_i32 = arith.constant 0 : i32
    %c0_i32_0 = arith.constant 0 : i32
    %c0_i32_1 = arith.constant 0 : i32
    return %c0_i32, %c0_i32_0 : i32, i32
  }
  func.func @transform_4(%arg0: i32) -> (i32, i32) {
    %c0_i32 = arith.constant 0 : i32
    %c0_i32_0 = arith.constant 0 : i32
    %c0_i32_1 = arith.constant 0 : i32
    return %c0_i32, %c0_i32_0 : i32, i32
  }
  func.func @transform_5(%arg0: i32) -> (i32, i32) {
    %c0_i32 = arith.constant 0 : i32
    %c0_i32_0 = arith.constant 0 : i32
    %c0_i32_1 = arith.constant 0 : i32
    return %c0_i32, %c0_i32_0 : i32, i32
  }
  func.func @transform_6(%arg0: i32) -> (i32, i32) {
    %c0_i32 = arith.constant 0 : i32
    %c0_i32_0 = arith.constant 0 : i32
    %c0_i32_1 = arith.constant 0 : i32
    return %c0_i32, %c0_i32_0 : i32, i32
  }
  func.func @transform_7(%arg0: i32) -> (i32, i32) {
    %c0_i32 = arith.constant 0 : i32
    %c0_i32_0 = arith.constant 0 : i32
    %c0_i32_1 = arith.constant 0 : i32
    return %c0_i32, %c0_i32_0 : i32, i32
  }
  func.func @transform_8(%arg0: i32) -> (i32, i32) {
    %c0_i32 = arith.constant 0 : i32
    %c0_i32_0 = arith.constant 0 : i32
    %c0_i32_1 = arith.constant 0 : i32
    return %c0_i32, %c0_i32_0 : i32, i32
  }
  func.func @transform_9(%arg0: i32) -> (i32, i32) {
    %c0_i32 = arith.constant 0 : i32
    %c0_i32_0 = arith.constant 0 : i32
    %c0_i32_1 = arith.constant 0 : i32
    return %c0_i32, %c0_i32_0 : i32, i32
  }
}

</mosaic_0001>

<llo_original>
// kernel: eq.30
$region0: #{eq.30}
  %s0 = inlined_call_operand.vmem [shape: s32[2,8], index: 0, kind: input, shape index: {}]
  %s1 = inlined_call_operand.vmem [shape: s32[16], index: 1, kind: output, shape index: {}]
  $region1: #{eq.30} parent=0
    #allocation0 [shape = 'u8[4096]{0}', space=vmem, size = 0x1000, scoped, tag = 'scoped mem for output reshape']
    #allocation1 [shape = 'u8[4096]{0}', space=vmem, size = 0x1000, scoped, tag = 'scoped mem for input reshape']
    %s3 = sshllo.u32 0, 2
    %v4 = vld [vmem:[%s0] sm:%s3]
    %5 = vst [vmem:[#allocation1] sm:%s3] %v4
    %v6 = vld [vmem:[#allocation1] sm:$0x1]
    %vm7 = vcmask 64512
    %8 = vst.msk [vmem:[#allocation0] sm:$0x1] %vm7, %v6
    %s9 = scalar_lea.vmem [#allocation1], 1
    %v10 = vld [vmem:[%s9] sm:$0x1]
    %11 = vrot.lane.b32.xlu0 %v10, 8
    %v12 = vpop.permute.xlu0 %11
    %vm13 = vcmask 130112
    %14 = vst.msk [vmem:[#allocation0] sm:$0x1] %vm13, %v12
    %s16 = sshllo.u32 0, 1
    %v18 = vld [vmem:[#allocation0] sm:%s16]
    %s19 = sshllo.u32 0, 1
    %20 = vst [vmem:[%s1] sm:%s19] %v18

// kernel: student_search_forward.1
$region0: #{student_search_forward.1}
  #allocation0 [shape = 'u32[]', space=smem, size = 0x4, offset = 0x4, fixed_abs, tag = 'smem constant byte address 0x4 - core index']
  #allocation1 [shape = 'u32[144,128]{1,0:T(1,128)}', space=vmem, size = 0x12000, scoped, tag = 'internal scratch']
  %s0 = inlined_call_operand.vmem [shape: f32[12], index: 0, kind: input, shape index: {}]
  %s1 = inlined_call_operand.vmem [shape: f32[16,16], index: 1, kind: input, shape index: {}]
  %s2 = inlined_call_operand.vmem [shape: f32[16,32], index: 2, kind: input, shape index: {}]
  %s3 = inlined_call_operand.vmem [shape: f32[32,320], index: 3, kind: input, shape index: {}]
  %s4 = inlined_call_operand.vmem [shape: f32[16,64], index: 4, kind: input, shape index: {}]
  %s5 = inlined_call_operand.vmem [shape: f32[16,128], index: 5, kind: input, shape index: {}]
  %s6 = inlined_call_operand.hbm [shape: f32[1,1], index: 6, kind: output, shape index: {0}]
  %s7 = inlined_call_operand.hbm [shape: f32[1,1], index: 7, kind: output, shape index: {1}]
  %s8 = inlined_call_operand.hbm [shape: f32[1,1], index: 8, kind: output, shape index: {2}]
  %s9 = inlined_call_operand.hbm [shape: f32[1,1], index: 9, kind: output, shape index: {3}]
  %10 = xla_tuple %s6, %s7, %s8, %s9
  %s11 = sld [smem:[#allocation0]]
  $region62: #{student_search_forward.1} parent=0
    _
  %s13 = ssub.s32 1, %s11
  %s14 = scalar_select 0, %s13, %s11
  $region1: #{student_search_forward.1} parent=0
    #allocation2 [shape = 'u8[512]{0}', space=smem, size = 0x200, scoped, tag = 'input window, operand 0, single buffered']
    #allocation3 [shape = 's32[1]{0}', space=sflag, size = 0x4, scoped, tag = 'scoped memory for student_search_forward.1']
    #allocation4 [shape = 's32[1]{0}', space=sflag, size = 0x4, scoped, tag = 'scoped memory for student_search_forward.1']
    #allocation5 [shape = 'u8[512]{0}', space=vmem, size = 0x400, scoped, tag = 'output window, operand 0, single buffered']
    #allocation6 [shape = 'u8[512]{0}', space=vmem, size = 0x400, scoped, tag = 'output window, operand 1, single buffered']
    #allocation7 [shape = 's32[1]{0}', space=sflag, size = 0x4, scoped, tag = 'scoped memory for student_search_forward.1']
    #allocation8 [shape = 'u8[512]{0}', space=vmem, size = 0x400, scoped, tag = 'output window, operand 2, single buffered']
    #allocation9 [shape = 'u8[512]{0}', space=vmem, size = 0x400, scoped, tag = 'output window, operand 3, single buffered']
    #allocation10 [shape = 's32[1]{0}', space=sflag, size = 0x4, scoped, tag = 'scoped memory for student_search_forward.1']
    %15 = vsyncpa [#allocation4], 0
    %16 = vsyncpa [#allocation3], 0
    %17 = vsyncpa [#allocation7], 0
    %18 = vsyncpa [#allocation10], 0
    // Predicated region
    $region2: #{student_search_forward.1} parent=1 // pred_check
      _
    $region3: #{student_search_forward.1} parent=1 // pred_check_branch
      %20 = sbr.rel (0) target = $region5
    $region4: #{student_search_forward.1} parent=1 // pred_region
      %s22 = ssub.s32 16, 16
      %23 = vsyncadd [#allocation4], %s22
      %s25 = sshll.u32 %s0, 4
      %s26 = int_to_ptr.vmem [resolvable:$true] %s25
      %28 = dma.vmem_to_smem %s26, 16, [#allocation2], [#allocation4]
    $region5: #{student_search_forward.1} parent=1 // pred_fallthru
      _
    // Predicated region
    $region6: #{student_search_forward.1} parent=1 // pred_check
      _
    $region7: #{student_search_forward.1} parent=1 // pred_check_branch
      %30 = sbr.rel (0) target = $region9
    $region8: #{student_search_forward.1} parent=1 // pred_region
      _
    $region9: #{student_search_forward.1} parent=1 // pred_fallthru
      _
    // Predicated region
    $region10: #{student_search_forward.1} parent=1 // pred_check
      _
    $region11: #{student_search_forward.1} parent=1 // pred_check_branch
      %32 = sbr.rel (0) target = $region13
    $region12: #{student_search_forward.1} parent=1 // pred_region
      _
    $region13: #{student_search_forward.1} parent=1 // pred_fallthru
      _
    // Predicated region
    $region14: #{student_search_forward.1} parent=1 // pred_check
      _
    $region15: #{student_search_forward.1} parent=1 // pred_check_branch
      %34 = sbr.rel (0) target = $region17
    $region16: #{student_search_forward.1} parent=1 // pred_region
      _
    $region17: #{student_search_forward.1} parent=1 // pred_fallthru
      _
    // Predicated region
    $region18: #{student_search_forward.1} parent=1 // pred_check
      _
    $region19: #{student_search_forward.1} parent=1 // pred_check_branch
      %36 = sbr.rel (0) target = $region21
    $region20: #{student_search_forward.1} parent=1 // pred_region
      _
    $region21: #{student_search_forward.1} parent=1 // pred_fallthru
      _
    // Predicated region
    $region22: #{student_search_forward.1} parent=1 // pred_check
      _
    $region23: #{student_search_forward.1} parent=1 // pred_check_branch
      %38 = sbr.rel (0) target = $region25
    $region24: #{student_search_forward.1} parent=1 // pred_region
      _
    $region25: #{student_search_forward.1} parent=1 // pred_fallthru
      _
    // Predicated region
    $region26: #{student_search_forward.1} parent=1 // pred_check
      _
    $region27: #{student_search_forward.1} parent=1 // pred_check_branch
      %40 = sbr.rel (0) target = $region29
    $region28: #{student_search_forward.1} parent=1 // pred_region
      %41 = dma.done [#allocation4], 16
    $region29: #{student_search_forward.1} parent=1 // pred_fallthru
      _
    %42 = sfence
    %v43 = vld [vmem:[%s3] sm:$0xff]
    %v44 = vld [vmem:[%s3 + $0x8] sm:$0xff]
    %v45 = vld [vmem:[%s3 + $0x10] sm:$0xff]
    %v46 = vld [vmem:[%s3 + $0x18] sm:$0xff]
    %v47 = vld [vmem:[%s3 + $0x20] sm:$0xff]
    %v48 = vld [vmem:[%s3 + $0x28] sm:$0xff]
    %v49 = vld [vmem:[%s3 + $0x30] sm:$0xff]
    %v50 = vld [vmem:[%s3 + $0x38] sm:$0xff]
    %v51 = vld [vmem:[%s3 + $0x40] sm:$0xff]
    %v52 = vld [vmem:[%s3 + $0x48] sm:$0xff]
    %v53 = vld [vmem:[%s3 + $0x50] sm:$0xff]
    %v54 = vld [vmem:[%s3 + $0x58] sm:$0xff]
    %v55 = vld [vmem:[%s1] sm:$0xff]
    %v56 = vld [vmem:[%s1 + $0x8] sm:$0xff]
    %v57 = vld [vmem:[%s2] sm:$0xff]
    %v58 = vld [vmem:[%s2 + $0x8] sm:$0xff]
    %vm59 = vcmask 130048
    %v61 = vsel %vm59, %v55, 0
    %v64 = vsel %vm59, %v56, 0
    %66 = vmatprep.subr.mxu0 0.0
    %67 = vmatpush1.msra.mxu0 %v57
    %68 = vmatprep.subr.mxu0 0.0
    %69 = vmatpush1.msra.mxu0 %v58
    %70 = vmatprep.subr.mxu0 0.0
    %71 = vmatpush1.msra.mxu0 0.0
    %72 = vmatprep.subr.mxu0 0.0
    %73 = vmatpush1.msra.mxu0 0.0
    %74 = vmatprep.subr.mxu0 0.0
    %75 = vmatpush1.msra.mxu0 0.0
    %76 = vmatprep.subr.mxu0 0.0
    %77 = vmatpush1.msra.mxu0 0.0
    %78 = vmatprep.subr.mxu0 0.0
    %79 = vmatpush1.msra.mxu0 0.0
    %80 = vmatprep.subr.mxu0 0.0
    %81 = vmatpush1.msra.mxu0 0.0
    %82 = vmatprep.subr.mxu0 0.0
    %83 = vmatpush1.msra.mxu0 0.0
    %84 = vmatprep.subr.mxu0 0.0
    %85 = vmatpush1.msra.mxu0 0.0
    %86 = vmatprep.subr.mxu0 0.0
    %87 = vmatpush1.msra.mxu0 0.0
    %88 = vmatprep.subr.mxu0 0.0
    %89 = vmatpush1.msra.mxu0 0.0
    %90 = vmatprep.subr.mxu0 0.0
    %91 = vmatpush1.msra.mxu0 0.0
    %92 = vmatprep.subr.mxu0 0.0
    %93 = vmatpush1.msra.mxu0 0.0
    %94 = vmatprep.subr.mxu0 0.0
    %95 = vmatpush1.msra.mxu0 0.0
    %96 = vmatprep.subr.mxu0 0.0
    %97 = vmatpush1.msra.mxu0 0.0
    %98 = vmatprep.subr.mxu0 0.0
    %99 = vmatpush1.msra.mxu0 0.0
    %100 = vmatprep.subr.mxu0 0.0
    %101 = vmatpush1.msra.mxu0 0.0
    %102 = vmatprep.subr.mxu0 0.0
    %103 = vmatpush1.msra.mxu0 0.0
    %104 = vmatprep.subr.mxu0 0.0
    %105 = vmatpush1.msra.mxu0 0.0
    %106 = vmatprep.subr.mxu0 0.0
    %107 = vmatpush1.msra.mxu0 0.0
    %108 = vmatprep.subr.mxu0 0.0
    %109 = vmatpush1.msra.mxu0 0.0
    %110 = vmatprep.subr.mxu0 0.0
    %111 = vmatpush1.msra.mxu0 0.0
    %112 = vmatprep.subr.mxu0 0.0
    %113 = vmatpush1.msra.mxu0 0.0
    %114 = vmatprep.subr.mxu0 0.0
    %115 = vmatpush1.msra.mxu0 0.0
    %116 = vmatprep.subr.mxu0 0.0
    %117 = vmatpush1.msra.mxu0 0.0
    %118 = vmatprep.subr.mxu0 0.0
    %119 = vmatpush1.msra.mxu0 0.0
    %120 = vmatprep.subr.mxu0 0.0
    %121 = vmatpush1.msra.mxu0 0.0
    %122 = vmatprep.subr.mxu0 0.0
    %123 = vmatpush1.msra.mxu0 0.0
    %124 = vmatprep.subr.mxu0 0.0
    %125 = vmatpush1.msra.mxu0 0.0
    %126 = vmatprep.subr.mxu0 0.0
    %127 = vmatpush1.msra.mxu0 0.0
    %128 = vmatprep.subr.mxu0 0.0
    %129 = vmatpush1.msra.mxu0 0.0
    %130 = vmatprep.mubr.f32.mxu0 0.0
    %131 = vmatmul.mubr.f32.gmra.mrb[0].mxu0 %v61
    %v132 = vpop.f32.mrb[0].mxu0
    %v133 = vadd.f32 0.0, %v132
    %v134 = vpop.f32.mrb[0].mxu0
    %135 = vmatprep.mubr.f32.mxu0 0.0
    %136 = vmatmul.mubr.f32.gmra.mrb[0].mxu0 %v64
    %v137 = vpop.f32.mrb[0].mxu0
    %v138 = vadd.f32 0.0, %v137
    %v139 = vpop.f32.mrb[0].mxu0
    %140 = vdwg.mxu0
    %s141 = sld [smem:[#allocation2 + $0x1]]
    %s142 = sld [smem:[#allocation2 + $0x5]]
    %s143 = sld [smem:[#allocation2 + $0x9]]
    %s144 = sld [smem:[#allocation2 + $0x2]]
    %s145 = sld [smem:[#allocation2 + $0x6]]
    %s146 = sld [smem:[#allocation2 + $0xa]]
    %s147 = sld [smem:[#allocation2 + $0x3]]
    %s148 = sld [smem:[#allocation2 + $0x7]]
    %s149 = sld [smem:[#allocation2 + $0xb]]
    %vm150 = vcmask 261120
    %v152 = vsel %vm150, %v133, 0
    %v155 = vsel %vm150, %v138, 0
    %157 = vmatprep.subr.mxu0 0.0
    %158 = vmatpush1.msra.mxu0 %v43
    %159 = vmatprep.subr.mxu0 0.0
    %160 = vmatpush1.msra.mxu0 %v46
    %161 = vmatprep.subr.mxu0 0.0
    %162 = vmatpush1.msra.mxu0 %v49
    %163 = vmatprep.subr.mxu0 0.0
    %164 = vmatpush1.msra.mxu0 %v52
    %165 = vmatprep.subr.mxu0 0.0
    %166 = vmatpush1.msra.mxu0 0.0
    %167 = vmatprep.subr.mxu0 0.0
    %168 = vmatpush1.msra.mxu0 0.0
    %169 = vmatprep.subr.mxu0 0.0
    %170 = vmatpush1.msra.mxu0 0.0
    %171 = vmatprep.subr.mxu0 0.0
    %172 = vmatpush1.msra.mxu0 0.0
    %173 = vmatprep.subr.mxu0 0.0
    %174 = vmatpush1.msra.mxu0 0.0
    %175 = vmatprep.subr.mxu0 0.0
    %176 = vmatpush1.msra.mxu0 0.0
    %177 = vmatprep.subr.mxu0 0.0
    %178 = vmatpush1.msra.mxu0 0.0
    %179 = vmatprep.subr.mxu0 0.0
    %180 = vmatpush1.msra.mxu0 0.0
    %181 = vmatprep.subr.mxu0 0.0
    %182 = vmatpush1.msra.mxu0 0.0
    %183 = vmatprep.subr.mxu0 0.0
    %184 = vmatpush1.msra.mxu0 0.0
    %185 = vmatprep.subr.mxu0 0.0
    %186 = vmatpush1.msra.mxu0 0.0
    %187 = vmatprep.subr.mxu0 0.0
    %188 = vmatpush1.msra.mxu0 0.0
    %189 = vmatprep.subr.mxu0 0.0
    %190 = vmatpush1.msra.mxu0 0.0
    %191 = vmatprep.subr.mxu0 0.0
    %192 = vmatpush1.msra.mxu0 0.0
    %193 = vmatprep.subr.mxu0 0.0
    %194 = vmatpush1.msra.mxu0 0.0
    %195 = vmatprep.subr.mxu0 0.0
    %196 = vmatpush1.msra.mxu0 0.0
    %197 = vmatprep.subr.mxu0 0.0
    %198 = vmatpush1.msra.mxu0 0.0
    %199 = vmatprep.subr.mxu0 0.0
    %200 = vmatpush1.msra.mxu0 0.0
    %201 = vmatprep.subr.mxu0 0.0
    %202 = vmatpush1.msra.mxu0 0.0
    %203 = vmatprep.subr.mxu0 0.0
    %204 = vmatpush1.msra.mxu0 0.0
    %205 = vmatprep.subr.mxu0 0.0
    %206 = vmatpush1.msra.mxu0 0.0
    %207 = vmatprep.subr.mxu0 0.0
    %208 = vmatpush1.msra.mxu0 0.0
    %209 = vmatprep.subr.mxu0 0.0
    %210 = vmatpush1.msra.mxu0 0.0
    %211 = vmatprep.subr.mxu0 0.0
    %212 = vmatpush1.msra.mxu0 0.0
    %213 = vmatprep.subr.mxu0 0.0
    %214 = vmatpush1.msra.mxu0 0.0
    %215 = vmatprep.subr.mxu0 0.0
    %216 = vmatpush1.msra.mxu0 0.0
    %217 = vmatprep.subr.mxu0 0.0
    %218 = vmatpush1.msra.mxu0 0.0
    %219 = vmatprep.subr.mxu0 0.0
    %220 = vmatpush1.msra.mxu0 0.0
    %221 = vmatprep.mubr.f32.mxu0 0.0
    %222 = vmatmul.mubr.f32.gmra.mrb[0].mxu0 %v152
    %v223 = vpop.f32.mrb[0].mxu0
    %v224 = vadd.f32 0.0, %v223
    %v225 = vpop.f32.mrb[0].mxu0
    %226 = vmatprep.mubr.f32.mxu0 0.0
    %227 = vmatmul.mubr.f32.gmra.mrb[0].mxu0 %v155
    %v228 = vpop.f32.mrb[0].mxu0
    %v229 = vadd.f32 0.0, %v228
    %v230 = vpop.f32.mrb[0].mxu0
    %231 = vdwg.mxu0
    %v232 = vstv %s141
    %v233 = vmul.f32 %v232, %v133
    %v234 = vmul.f32 %v232, %v138
    %v235 = vstv %s144
    %v236 = vmul.f32 %v235, %v224
    %v237 = vmul.f32 %v235, %v229
    %240 = vrot.lane.b32.xlu0 %v236, 96
    %v241 = vpop.permute.xlu0 %240
    %242 = vrot.lane.b32.xlu0 %v237, 96
    %v243 = vpop.permute.xlu0 %242
    %v246 = vadd.f32 %v233, %v241
    %v247 = vadd.f32 %v234, %v243
    %v248 = vmax.f32 %v224, 0.0
    %v249 = vmax.f32 %v229, 0.0
    %v250 = vstv %s147
    %v251 = vmul.f32 %v250, %v248
    %v252 = vmul.f32 %v250, %v249
    %255 = vrot.lane.b32.xlu0 %v251, 96
    %v256 = vpop.permute.xlu0 %255
    %257 = vrot.lane.b32.xlu0 %v252, 96
    %v258 = vpop.permute.xlu0 %257
    %v261 = vadd.f32 %v246, %v256
    %v262 = vadd.f32 %v247, %v258
    %267 = vrot.lane.b32.xlu0 %v43, 32
    %v268 = vpop.permute.xlu0 %267
    %269 = vrot.lane.b32.xlu0 %v46, 32
    %v270 = vpop.permute.xlu0 %269
    %271 = vrot.lane.b32.xlu0 %v49, 32
    %v272 = vpop.permute.xlu0 %271
    %273 = vrot.lane.b32.xlu0 %v52, 32
    %v274 = vpop.permute.xlu0 %273
    %v280 = vsel %vm150, %v261, 0
    %v283 = vsel %vm150, %v262, 0
    %285 = vmatprep.subr.mxu0 0.0
    %286 = vmatpush1.msra.mxu0 %v268
    %287 = vmatprep.subr.mxu0 0.0
    %288 = vmatpush1.msra.mxu0 %v270
    %289 = vmatprep.subr.mxu0 0.0
    %290 = vmatpush1.msra.mxu0 %v272
    %291 = vmatprep.subr.mxu0 0.0
    %292 = vmatpush1.msra.mxu0 %v274
    %293 = vmatprep.subr.mxu0 0.0
    %294 = vmatpush1.msra.mxu0 0.0
    %295 = vmatprep.subr.mxu0 0.0
    %296 = vmatpush1.msra.mxu0 0.0
    %297 = vmatprep.subr.mxu0 0.0
    %298 = vmatpush1.msra.mxu0 0.0
    %299 = vmatprep.subr.mxu0 0.0
    %300 = vmatpush1.msra.mxu0 0.0
    %301 = vmatprep.subr.mxu0 0.0
    %302 = vmatpush1.msra.mxu0 0.0
    %303 = vmatprep.subr.mxu0 0.0
    %304 = vmatpush1.msra.mxu0 0.0
    %305 = vmatprep.subr.mxu0 0.0
    %306 = vmatpush1.msra.mxu0 0.0
    %307 = vmatprep.subr.mxu0 0.0
    %308 = vmatpush1.msra.mxu0 0.0
    %309 = vmatprep.subr.mxu0 0.0
    %310 = vmatpush1.msra.mxu0 0.0
    %311 = vmatprep.subr.mxu0 0.0
    %312 = vmatpush1.msra.mxu0 0.0
    %313 = vmatprep.subr.mxu0 0.0
    %314 = vmatpush1.msra.mxu0 0.0
    %315 = vmatprep.subr.mxu0 0.0
    %316 = vmatpush1.msra.mxu0 0.0
    %317 = vmatprep.subr.mxu0 0.0
    %318 = vmatpush1.msra.mxu0 0.0
    %319 = vmatprep.subr.mxu0 0.0
    %320 = vmatpush1.msra.mxu0 0.0
    %321 = vmatprep.subr.mxu0 0.0
    %322 = vmatpush1.msra.mxu0 0.0
    %323 = vmatprep.subr.mxu0 0.0
    %324 = vmatpush1.msra.mxu0 0.0
    %325 = vmatprep.subr.mxu0 0.0
    %326 = vmatpush1.msra.mxu0 0.0
    %327 = vmatprep.subr.mxu0 0.0
    %328 = vmatpush1.msra.mxu0 0.0
    %329 = vmatprep.subr.mxu0 0.0
    %330 = vmatpush1.msra.mxu0 0.0
    %331 = vmatprep.subr.mxu0 0.0
    %332 = vmatpush1.msra.mxu0 0.0
    %333 = vmatprep.subr.mxu0 0.0
    %334 = vmatpush1.msra.mxu0 0.0
    %335 = vmatprep.subr.mxu0 0.0
    %336 = vmatpush1.msra.mxu0 0.0
    %337 = vmatprep.subr.mxu0 0.0
    %338 = vmatpush1.msra.mxu0 0.0
    %339 = vmatprep.subr.mxu0 0.0
    %340 = vmatpush1.msra.mxu0 0.0
    %341 = vmatprep.subr.mxu0 0.0
    %342 = vmatpush1.msra.mxu0 0.0
    %343 = vmatprep.subr.mxu0 0.0
    %344 = vmatpush1.msra.mxu0 0.0
    %345 = vmatprep.subr.mxu0 0.0
    %346 = vmatpush1.msra.mxu0 0.0
    %347 = vmatprep.subr.mxu0 0.0
    %348 = vmatpush1.msra.mxu0 0.0
    %349 = vmatprep.mubr.f32.mxu0 0.0
    %350 = vmatmul.mubr.f32.gmra.mrb[0].mxu0 %v280
    %v351 = vpop.f32.mrb[0].mxu0
    %v352 = vadd.f32 0.0, %v351
    %v353 = vpop.f32.mrb[0].mxu0
    %354 = vmatprep.mubr.f32.mxu0 0.0
    %355 = vmatmul.mubr.f32.gmra.mrb[0].mxu0 %v283
    %v356 = vpop.f32.mrb[0].mxu0
    %v357 = vadd.f32 0.0, %v356
    %v358 = vpop.f32.mrb[0].mxu0
    %359 = vdwg.mxu0
    %v360 = vstv %s142
    %v361 = vmul.f32 %v360, %v133
    %v362 = vmul.f32 %v360, %v138
    %v363 = vstv %s145
    %v364 = vmul.f32 %v363, %v224
    %v365 = vmul.f32 %v363, %v229
    %368 = vrot.lane.b32.xlu0 %v364, 64
    %v369 = vpop.permute.xlu0 %368
    %370 = vrot.lane.b32.xlu0 %v365, 64
    %v371 = vpop.permute.xlu0 %370
    %v374 = vadd.f32 %v361, %v369
    %v375 = vadd.f32 %v362, %v371
    %v376 = vstv %s148
    %v377 = vmul.f32 %v376, %v248
    %v378 = vmul.f32 %v376, %v249
    %381 = vrot.lane.b32.xlu0 %v377, 64
    %v382 = vpop.permute.xlu0 %381
    %383 = vrot.lane.b32.xlu0 %v378, 64
    %v384 = vpop.permute.xlu0 %383
    %v387 = vadd.f32 %v374, %v382
    %v388 = vadd.f32 %v375, %v384
    %v389 = vstv %s143
    %v390 = vmul.f32 %v389, %v261
    %v391 = vmul.f32 %v389, %v262
    %v392 = vadd.f32 %v387, %v390
    %v393 = vadd.f32 %v388, %v391
    %v394 = vstv %s146
    %v395 = vmul.f32 %v394, %v352
    %v396 = vmul.f32 %v394, %v357
    %v397 = vadd.f32 %v392, %v395
    %v398 = vadd.f32 %v393, %v396
    %v399 = vmax.f32 %v352, 0.0
    %v400 = vmax.f32 %v357, 0.0
    %v401 = vstv %s149
    %v402 = vmul.f32 %v401, %v399
    %v403 = vmul.f32 %v401, %v400
    %v404 = vadd.f32 %v397, %v402
    %v405 = vadd.f32 %v398, %v403
    %v407 = vsel %vm150, %v404, 0
    %v410 = vsel %vm150, %v405, 0
    %412 = vmatprep.subr.mxu0 0.0
    %413 = vmatpush1.msra.mxu0 %v44
    %414 = vmatprep.subr.mxu0 0.0
    %415 = vmatpush1.msra.mxu0 %v47
    %416 = vmatprep.subr.mxu0 0.0
    %417 = vmatpush1.msra.mxu0 %v50
    %418 = vmatprep.subr.mxu0 0.0
    %419 = vmatpush1.msra.mxu0 %v53
    %420 = vmatprep.subr.mxu0 0.0
    %421 = vmatpush1.msra.mxu0 0.0
    %422 = vmatprep.subr.mxu0 0.0
    %423 = vmatpush1.msra.mxu0 0.0
    %424 = vmatprep.subr.mxu0 0.0
    %425 = vmatpush1.msra.mxu0 0.0
    %426 = vmatprep.subr.mxu0 0.0
    %427 = vmatpush1.msra.mxu0 0.0
    %428 = vmatprep.subr.mxu0 0.0
    %429 = vmatpush1.msra.mxu0 0.0
    %430 = vmatprep.subr.mxu0 0.0
    %431 = vmatpush1.msra.mxu0 0.0
    %432 = vmatprep.subr.mxu0 0.0
    %433 = vmatpush1.msra.mxu0 0.0
    %434 = vmatprep.subr.mxu0 0.0
    %435 = vmatpush1.msra.mxu0 0.0
    %436 = vmatprep.subr.mxu0 0.0
    %437 = vmatpush1.msra.mxu0 0.0
    %438 = vmatprep.subr.mxu0 0.0
    %439 = vmatpush1.msra.mxu0 0.0
    %440 = vmatprep.subr.mxu0 0.0
    %441 = vmatpush1.msra.mxu0 0.0
    %442 = vmatprep.subr.mxu0 0.0
    %443 = vmatpush1.msra.mxu0 0.0
    %444 = vmatprep.subr.mxu0 0.0
    %445 = vmatpush1.msra.mxu0 0.0
    %446 = vmatprep.subr.mxu0 0.0
    %447 = vmatpush1.msra.mxu0 0.0
    %448 = vmatprep.subr.mxu0 0.0
    %449 = vmatpush1.msra.mxu0 0.0
    %450 = vmatprep.subr.mxu0 0.0
    %451 = vmatpush1.msra.mxu0 0.0
    %452 = vmatprep.subr.mxu0 0.0
    %453 = vmatpush1.msra.mxu0 0.0
    %454 = vmatprep.subr.mxu0 0.0
    %455 = vmatpush1.msra.mxu0 0.0
    %456 = vmatprep.subr.mxu0 0.0
    %457 = vmatpush1.msra.mxu0 0.0
    %458 = vmatprep.subr.mxu0 0.0
    %459 = vmatpush1.msra.mxu0 0.0
    %460 = vmatprep.subr.mxu0 0.0
    %461 = vmatpush1.msra.mxu0 0.0
    %462 = vmatprep.subr.mxu0 0.0
    %463 = vmatpush1.msra.mxu0 0.0
    %464 = vmatprep.subr.mxu0 0.0
    %465 = vmatpush1.msra.mxu0 0.0
    %466 = vmatprep.subr.mxu0 0.0
    %467 = vmatpush1.msra.mxu0 0.0
    %468 = vmatprep.subr.mxu0 0.0
    %469 = vmatpush1.msra.mxu0 0.0
    %470 = vmatprep.subr.mxu0 0.0
    %471 = vmatpush1.msra.mxu0 0.0
    %472 = vmatprep.subr.mxu0 0.0
    %473 = vmatpush1.msra.mxu0 0.0
    %474 = vmatprep.subr.mxu0 0.0
    %475 = vmatpush1.msra.mxu0 0.0
    %476 = vmatprep.mubr.f32.mxu0 0.0
    %477 = vmatmul.mubr.f32.gmra.mrb[0].mxu0 %v407
    %v478 = vpop.f32.mrb[0].mxu0
    %v479 = vadd.f32 0.0, %v478
    %v480 = vpop.f32.mrb[0].mxu0
    %481 = vmatprep.mubr.f32.mxu0 0.0
    %482 = vmatmul.mubr.f32.gmra.mrb[0].mxu0 %v410
    %v483 = vpop.f32.mrb[0].mxu0
    %v484 = vadd.f32 0.0, %v483
    %v485 = vpop.f32.mrb[0].mxu0
    %486 = vdwg.mxu0
    %v487 = vmul.f32 %v232, %v404
    %v488 = vmul.f32 %v232, %v405
    %v489 = vmul.f32 %v235, %v479
    %v490 = vmul.f32 %v235, %v484
    %493 = vrot.lane.b32.xlu0 %v489, 96
    %v494 = vpop.permute.xlu0 %493
    %495 = vrot.lane.b32.xlu0 %v490, 96
    %v496 = vpop.permute.xlu0 %495
    %v499 = vadd.f32 %v487, %v494
    %v500 = vadd.f32 %v488, %v496
    %v501 = vmax.f32 %v479, 0.0
    %v502 = vmax.f32 %v484, 0.0
    %v503 = vmul.f32 %v250, %v501
    %v504 = vmul.f32 %v250, %v502
    %507 = vrot.lane.b32.xlu0 %v503, 96
    %v508 = vpop.permute.xlu0 %507
    %509 = vrot.lane.b32.xlu0 %v504, 96
    %v510 = vpop.permute.xlu0 %509
    %v513 = vadd.f32 %v499, %v508
    %v514 = vadd.f32 %v500, %v510
    %519 = vrot.lane.b32.xlu0 %v44, 32
    %v520 = vpop.permute.xlu0 %519
    %521 = vrot.lane.b32.xlu0 %v47, 32
    %v522 = vpop.permute.xlu0 %521
    %523 = vrot.lane.b32.xlu0 %v50, 32
    %v524 = vpop.permute.xlu0 %523
    %525 = vrot.lane.b32.xlu0 %v53, 32
    %v526 = vpop.permute.xlu0 %525
    %v532 = vsel %vm150, %v513, 0
    %v535 = vsel %vm150, %v514, 0
    %537 = vmatprep.subr.mxu0 0.0
    %538 = vmatpush1.msra.mxu0 %v520
    %539 = vmatprep.subr.mxu0 0.0
    %540 = vmatpush1.msra.mxu0 %v522
    %541 = vmatprep.subr.mxu0 0.0
    %542 = vmatpush1.msra.mxu0 %v524
    %543 = vmatprep.subr.mxu0 0.0
    %544 = vmatpush1.msra.mxu0 %v526
    %545 = vmatprep.subr.mxu0 0.0
    %546 = vmatpush1.msra.mxu0 0.0
    %547 = vmatprep.subr.mxu0 0.0
    %548 = vmatpush1.msra.mxu0 0.0
    %549 = vmatprep.subr.mxu0 0.0
    %550 = vmatpush1.msra.mxu0 0.0
    %551 = vmatprep.subr.mxu0 0.0
    %552 = vmatpush1.msra.mxu0 0.0
    %553 = vmatprep.subr.mxu0 0.0
    %554 = vmatpush1.msra.mxu0 0.0
    %555 = vmatprep.subr.mxu0 0.0
    %556 = vmatpush1.msra.mxu0 0.0
    %557 = vmatprep.subr.mxu0 0.0
    %558 = vmatpush1.msra.mxu0 0.0
    %559 = vmatprep.subr.mxu0 0.0
    %560 = vmatpush1.msra.mxu0 0.0
    %561 = vmatprep.subr.mxu0 0.0
    %562 = vmatpush1.msra.mxu0 0.0
    %563 = vmatprep.subr.mxu0 0.0
    %564 = vmatpush1.msra.mxu0 0.0
    %565 = vmatprep.subr.mxu0 0.0
    %566 = vmatpush1.msra.mxu0 0.0
    %567 = vmatprep.subr.mxu0 0.0
    %568 = vmatpush1.msra.mxu0 0.0
    %569 = vmatprep.subr.mxu0 0.0
    %570 = vmatpush1.msra.mxu0 0.0
    %571 = vmatprep.subr.mxu0 0.0
    %572 = vmatpush1.msra.mxu0 0.0
    %573 = vmatprep.subr.mxu0 0.0
    %574 = vmatpush1.msra.mxu0 0.0
    %575 = vmatprep.subr.mxu0 0.0
    %576 = vmatpush1.msra.mxu0 0.0
    %577 = vmatprep.subr.mxu0 0.0
    %578 = vmatpush1.msra.mxu0 0.0
    %579 = vmatprep.subr.mxu0 0.0
    %580 = vmatpush1.msra.mxu0 0.0
    %581 = vmatprep.subr.mxu0 0.0
    %582 = vmatpush1.msra.mxu0 0.0
    %583 = vmatprep.subr.mxu0 0.0
    %584 = vmatpush1.msra.mxu0 0.0
    %585 = vmatprep.subr.mxu0 0.0
    %586 = vmatpush1.msra.mxu0 0.0
    %587 = vmatprep.subr.mxu0 0.0
    %588 = vmatpush1.msra.mxu0 0.0
    %589 = vmatprep.subr.mxu0 0.0
    %590 = vmatpush1.msra.mxu0 0.0
    %591 = vmatprep.subr.mxu0 0.0
    %592 = vmatpush1.msra.mxu0 0.0
    %593 = vmatprep.subr.mxu0 0.0
    %594 = vmatpush1.msra.mxu0 0.0
    %595 = vmatprep.subr.mxu0 0.0
    %596 = vmatpush1.msra.mxu0 0.0
    %597 = vmatprep.subr.mxu0 0.0
    %598 = vmatpush1.msra.mxu0 0.0
    %599 = vmatprep.subr.mxu0 0.0
    %600 = vmatpush1.msra.mxu0 0.0
    %601 = vmatprep.mubr.f32.mxu0 0.0
    %602 = vmatmul.mubr.f32.gmra.mrb[0].mxu0 %v532
    %v603 = vpop.f32.mrb[0].mxu0
    %v604 = vadd.f32 0.0, %v603
    %v605 = vpop.f32.mrb[0].mxu0
    %606 = vmatprep.mubr.f32.mxu0 0.0
    %607 = vmatmul.mubr.f32.gmra.mrb[0].mxu0 %v535
    %v608 = vpop.f32.mrb[0].mxu0
    %v609 = vadd.f32 0.0, %v608
    %v610 = vpop.f32.mrb[0].mxu0
    %611 = vdwg.mxu0
    %v612 = vmul.f32 %v360, %v404
    %v613 = vmul.f32 %v360, %v405
    %v614 = vmul.f32 %v363, %v479
    %v615 = vmul.f32 %v363, %v484
    %618 = vrot.lane.b32.xlu0 %v614, 64
    %v619 = vpop.permute.xlu0 %618
    %620 = vrot.lane.b32.xlu0 %v615, 64
    %v621 = vpop.permute.xlu0 %620
    %v624 = vadd.f32 %v612, %v619
    %v625 = vadd.f32 %v613, %v621
    %v626 = vmul.f32 %v376, %v501
    %v627 = vmul.f32 %v376, %v502
    %630 = vrot.lane.b32.xlu0 %v626, 64
    %v631 = vpop.permute.xlu0 %630
    %632 = vrot.lane.b32.xlu0 %v627, 64
    %v633 = vpop.permute.xlu0 %632
    %v636 = vadd.f32 %v624, %v631
    %v637 = vadd.f32 %v625, %v633
    %v638 = vmul.f32 %v389, %v513
    %v639 = vmul.f32 %v389, %v514
    %v640 = vadd.f32 %v636, %v638
    %v641 = vadd.f32 %v637, %v639
    %v642 = vmul.f32 %v394, %v604
    %v643 = vmul.f32 %v394, %v609
    %v644 = vadd.f32 %v640, %v642
    %v645 = vadd.f32 %v641, %v643
    %v646 = vmax.f32 %v604, 0.0
    %v647 = vmax.f32 %v609, 0.0
    %v648 = vmul.f32 %v401, %v646
    %v649 = vmul.f32 %v401, %v647
    %v650 = vadd.f32 %v644, %v648
    %v651 = vadd.f32 %v645, %v649
    %v653 = vsel %vm150, %v650, 0
    %v656 = vsel %vm150, %v651, 0
    %658 = vmatprep.subr.mxu0 0.0
    %659 = vmatpush1.msra.mxu0 %v45
    %660 = vmatprep.subr.mxu0 0.0
    %661 = vmatpush1.msra.mxu0 %v48
    %662 = vmatprep.subr.mxu0 0.0
    %663 = vmatpush1.msra.mxu0 %v51
    %664 = vmatprep.subr.mxu0 0.0
    %665 = vmatpush1.msra.mxu0 %v54
    %666 = vmatprep.subr.mxu0 0.0
    %667 = vmatpush1.msra.mxu0 0.0
    %668 = vmatprep.subr.mxu0 0.0
    %669 = vmatpush1.msra.mxu0 0.0
    %670 = vmatprep.subr.mxu0 0.0
    %671 = vmatpush1.msra.mxu0 0.0
    %672 = vmatprep.subr.mxu0 0.0
    %673 = vmatpush1.msra.mxu0 0.0
    %674 = vmatprep.subr.mxu0 0.0
    %675 = vmatpush1.msra.mxu0 0.0
    %676 = vmatprep.subr.mxu0 0.0
    %677 = vmatpush1.msra.mxu0 0.0
    %678 = vmatprep.subr.mxu0 0.0
    %679 = vmatpush1.msra.mxu0 0.0
    %680 = vmatprep.subr.mxu0 0.0
    %681 = vmatpush1.msra.mxu0 0.0
    %682 = vmatprep.subr.mxu0 0.0
    %683 = vmatpush1.msra.mxu0 0.0
    %684 = vmatprep.subr.mxu0 0.0
    %685 = vmatpush1.msra.mxu0 0.0
    %686 = vmatprep.subr.mxu0 0.0
    %687 = vmatpush1.msra.mxu0 0.0
    %688 = vmatprep.subr.mxu0 0.0
    %689 = vmatpush1.msra.mxu0 0.0
    %690 = vmatprep.subr.mxu0 0.0
    %691 = vmatpush1.msra.mxu0 0.0
    %692 = vmatprep.subr.mxu0 0.0
    %693 = vmatpush1.msra.mxu0 0.0
    %694 = vmatprep.subr.mxu0 0.0
    %695 = vmatpush1.msra.mxu0 0.0
    %696 = vmatprep.subr.mxu0 0.0
    %697 = vmatpush1.msra.mxu0 0.0
    %698 = vmatprep.subr.mxu0 0.0
    %699 = vmatpush1.msra.mxu0 0.0
    %700 = vmatprep.subr.mxu0 0.0
    %701 = vmatpush1.msra.mxu0 0.0
    %702 = vmatprep.subr.mxu0 0.0
    %703 = vmatpush1.msra.mxu0 0.0
    %704 = vmatprep.subr.mxu0 0.0
    %705 = vmatpush1.msra.mxu0 0.0
    %706 = vmatprep.subr.mxu0 0.0
    %707 = vmatpush1.msra.mxu0 0.0
    %708 = vmatprep.subr.mxu0 0.0
    %709 = vmatpush1.msra.mxu0 0.0
    %710 = vmatprep.subr.mxu0 0.0
    %711 = vmatpush1.msra.mxu0 0.0
    %712 = vmatprep.subr.mxu0 0.0
    %713 = vmatpush1.msra.mxu0 0.0
    %714 = vmatprep.subr.mxu0 0.0
    %715 = vmatpush1.msra.mxu0 0.0
    %716 = vmatprep.subr.mxu0 0.0
    %717 = vmatpush1.msra.mxu0 0.0
    %718 = vmatprep.subr.mxu0 0.0
    %719 = vmatpush1.msra.mxu0 0.0
    %720 = vmatprep.subr.mxu0 0.0
    %721 = vmatpush1.msra.mxu0 0.0
    %722 = vmatprep.mubr.f32.mxu0 0.0
    %723 = vmatmul.mubr.f32.gmra.mrb[0].mxu0 %v653
    %v724 = vpop.f32.mrb[0].mxu0
    %v725 = vadd.f32 0.0, %v724
    %v726 = vpop.f32.mrb[0].mxu0
    %727 = vmatprep.mubr.f32.mxu0 0.0
    %728 = vmatmul.mubr.f32.gmra.mrb[0].mxu0 %v656
    %v729 = vpop.f32.mrb[0].mxu0
    %v730 = vadd.f32 0.0, %v729
    %v731 = vpop.f32.mrb[0].mxu0
    %732 = vdwg.mxu0
    %v733 = vld [vmem:[%s4] sm:$0xff]
    %v734 = vld [vmem:[%s4 + $0x8] sm:$0xff]
    %v735 = vld [vmem:[%s5] sm:$0xff]
    %v736 = vld [vmem:[%s5 + $0x8] sm:$0xff]
    %vm737 = vcmask 351488
    %v738 = vsel %vm737, %v725, -inf
    %739 = vmax.xlane.f32.xlu0 %v738
    %v740 = vpop.xlane.xlu0 %739
    %v741 = vsel %vm737, %v730, -inf
    %742 = vmax.xlane.f32.xlu0 %v741
    %v743 = vpop.xlane.xlu0 %742
    %v744 = vsub.f32 %v725, %v740
    %v745 = vsub.f32 %v730, %v743
    %v746 = vmul.f32 %v744, 1.442695
    %v747 = vpow.pop %v746
    %v748 = vmul.f32 %v745, 1.442695
    %v749 = vpow.pop %v748
    %752 = vrot.lane.b32.xlu0 %v747, 96
    %v753 = vpop.permute.xlu0 %752
    %754 = vrot.lane.b32.xlu0 %v749, 96
    %v755 = vpop.permute.xlu0 %754
    %vm758 = vcmask 89088
    %v759 = vsel %vm758, %v753, 0.0
    %760 = vadd.xlane.f32.xlu0 %v759
    %v761 = vpop.xlane.xlu0 %760
    %v762 = vsel %vm758, %v755, 0.0
    %763 = vadd.xlane.f32.xlu0 %v762
    %v764 = vpop.xlane.xlu0 %763
    %v765 = vlog2.pop %v761
    %v766 = vmul.f32 %v765, 0.6931472
    %v767 = vlog2.pop %v764
    %v768 = vmul.f32 %v767, 0.6931472
    %v769 = vadd.f32 %v740, %v766
    %v770 = vadd.f32 %v743, %v768
    %v771 = vsel %vm758, %v733, 0.0
    %772 = vadd.xlane.f32.xlu0 %v771
    %v773 = vpop.xlane.xlu0 %772
    %v774 = vsel %vm758, %v734, 0.0
    %775 = vadd.xlane.f32.xlu0 %v774
    %v776 = vpop.xlane.xlu0 %775
    %v777 = vmul.f32 %v773, %v769
    %v778 = vmul.f32 %v776, %v770
    %v779 = vadd.f32 %v777, 0.0
    %v780 = vadd.f32 %v778, 0.0
    %v781 = vadd.f32 %v779, %v780
    %v782 = vrot.slane %v781, 4
    %v783 = vadd.f32 %v781, %v782
    %v784 = vrot.slane %v783, 2
    %v785 = vadd.f32 %v783, %v784
    %v786 = vrot.slane %v785, 1
    %v787 = vadd.f32 %v785, %v786
    %790 = vrot.lane.b32.xlu0 %v725, 96
    %v791 = vpop.permute.xlu0 %790
    %792 = vrot.lane.b32.xlu0 %v730, 96
    %v793 = vpop.permute.xlu0 %792
    %v796 = vmul.f32 %v733, %v791
    %v797 = vmul.f32 %v734, %v793
    %v798 = vsel %vm758, %v796, 0.0
    %799 = vadd.xlane.f32.xlu0 %v798
    %v800 = vpop.xlane.xlu0 %799
    %v801 = vsel %vm758, %v797, 0.0
    %802 = vadd.xlane.f32.xlu0 %v801
    %v803 = vpop.xlane.xlu0 %802
    %v804 = vadd.f32 %v800, %v803
    %v805 = vrot.slane %v804, 4
    %v806 = vadd.f32 %v804, %v805
    %v807 = vrot.slane %v806, 2
    %v808 = vadd.f32 %v806, %v807
    %v809 = vrot.slane %v808, 1
    %v810 = vadd.f32 %v808, %v809
    %v811 = vsub.f32 %v787, %v810
    %v812 = vadd.f32 %v773, 0.0
    %v813 = vadd.f32 %v776, 0.0
    %v814 = vadd.f32 %v812, %v813
    %v815 = vrot.slane %v814, 4
    %v816 = vadd.f32 %v814, %v815
    %v817 = vrot.slane %v816, 2
    %v818 = vadd.f32 %v816, %v817
    %v819 = vrot.slane %v818, 1
    %v820 = vadd.f32 %v818, %v819
    %v821 = vmax.f32 %v820, 1.0
    %v822 = vrcp.pop %v821
    %v823 = vmul.f32 %v811, %v822
    %vm824 = vcmask 0
    %825 = vst.msk [vmem:[#allocation5] sm:$0x1] %vm824, %v823
    %v826 = vsub.f32 %v224, %v735
    %v827 = vsub.f32 %v229, %v736
    %v828 = vmul.f32 %v826, %v826
    %v829 = vmul.f32 %v827, %v827
    %v830 = vsel %vm150, %v828, 0.0
    %831 = vadd.xlane.f32.xlu0 %v830
    %v832 = vpop.xlane.xlu0 %831
    %v833 = vsel %vm150, %v829, 0.0
    %834 = vadd.xlane.f32.xlu0 %v833
    %v835 = vpop.xlane.xlu0 %834
    %v836 = vadd.f32 %v832, %v835
    %v837 = vrot.slane %v836, 4
    %v838 = vadd.f32 %v836, %v837
    %v839 = vrot.slane %v838, 2
    %v840 = vadd.f32 %v838, %v839
    %v841 = vrot.slane %v840, 1
    %v842 = vadd.f32 %v840, %v841
    %v843 = vmul.f32 %v842, 0.001953125
    %844 = vst.msk [vmem:[#allocation6] sm:$0x1] %vm824, %v843
    %v845 = vsel %vm150, %v479, -inf
    %846 = vmax.xlane.f32.xlu0 %v845
    %v847 = vpop.xlane.xlu0 %846
    %v848 = vsel %vm150, %v484, -inf
    %849 = vmax.xlane.f32.xlu0 %v848
    %v850 = vpop.xlane.xlu0 %849
    %v851 = vsub.f32 %v479, %v847
    %v852 = vsub.f32 %v484, %v850
    %v853 = vmul.f32 %v851, 1.442695
    %v854 = vpow.pop %v853
    %v855 = vmul.f32 %v852, 1.442695
    %v856 = vpow.pop %v855
    %v857 = vsel %vm150, %v854, 0.0
    %858 = vadd.xlane.f32.xlu0 %v857
    %v859 = vpop.xlane.xlu0 %858
    %v860 = vsel %vm150, %v856, 0.0
    %861 = vadd.xlane.f32.xlu0 %v860
    %v862 = vpop.xlane.xlu0 %861
    %v863 = vlog2.pop %v859
    %v864 = vmul.f32 %v863, 0.6931472
    %v865 = vlog2.pop %v862
    %v866 = vmul.f32 %v865, 0.6931472
    %v867 = vsub.f32 %v851, %v864
    %v868 = vsub.f32 %v852, %v866
    %v869 = vrcp.pop %v859
    %v870 = vrcp.pop %v862
    %v871 = vmul.f32 %v854, %v869
    %v872 = vmul.f32 %v856, %v870
    %v873 = vsel %vm150, %v725, -inf
    %874 = vmax.xlane.f32.xlu0 %v873
    %v875 = vpop.xlane.xlu0 %874
    %v876 = vsel %vm150, %v730, -inf
    %877 = vmax.xlane.f32.xlu0 %v876
    %v878 = vpop.xlane.xlu0 %877
    %v879 = vsub.f32 %v725, %v875
    %v880 = vsub.f32 %v730, %v878
    %v881 = vmul.f32 %v879, 1.442695
    %v882 = vpow.pop %v881
    %v883 = vmul.f32 %v880, 1.442695
    %v884 = vpow.pop %v883
    %v885 = vsel %vm150, %v882, 0.0
    %886 = vadd.xlane.f32.xlu0 %v885
    %v887 = vpop.xlane.xlu0 %886
    %v888 = vsel %vm150, %v884, 0.0
    %889 = vadd.xlane.f32.xlu0 %v888
    %v890 = vpop.xlane.xlu0 %889
    %v891 = vlog2.pop %v887
    %v892 = vmul.f32 %v891, 0.6931472
    %v893 = vlog2.pop %v890
    %v894 = vmul.f32 %v893, 0.6931472
    %v895 = vsub.f32 %v879, %v892
    %v896 = vsub.f32 %v880, %v894
    %v897 = vrcp.pop %v887
    %v898 = vrcp.pop %v890
    %v899 = vmul.f32 %v882, %v897
    %v900 = vmul.f32 %v884, %v898
    %vm901 = vcmask 523520
    %v902 = vsel %vm901, %v735, -inf
    %903 = vmax.xlane.f32.xlu0 %v902
    %v904 = vpop.xlane.xlu0 %903
    %v905 = vsel %vm901, %v736, -inf
    %906 = vmax.xlane.f32.xlu0 %v905
    %v907 = vpop.xlane.xlu0 %906
    %v908 = vsub.f32 %v735, %v904
    %v909 = vsub.f32 %v736, %v907
    %v910 = vmul.f32 %v908, 1.442695
    %v911 = vpow.pop %v910
    %v912 = vmul.f32 %v909, 1.442695
    %v913 = vpow.pop %v912
    %916 = vrot.lane.b32.xlu0 %v911, 96
    %v917 = vpop.permute.xlu0 %916
    %918 = vrot.lane.b32.xlu0 %v913, 96
    %v919 = vpop.permute.xlu0 %918
    %v922 = vsel %vm150, %v917, 0.0
    %923 = vadd.xlane.f32.xlu0 %v922
    %v924 = vpop.xlane.xlu0 %923
    %v925 = vsel %vm150, %v919, 0.0
    %926 = vadd.xlane.f32.xlu0 %v925
    %v927 = vpop.xlane.xlu0 %926
    %v928 = vlog2.pop %v924
    %v929 = vmul.f32 %v928, 0.6931472
    %v930 = vlog2.pop %v927
    %v931 = vmul.f32 %v930, 0.6931472
    %v932 = vsub.f32 %v908, %v929
    %v933 = vsub.f32 %v909, %v931
    %vm934 = vcmask 785920
    %v935 = vsel %vm934, %v735, -inf
    %936 = vmax.xlane.f32.xlu0 %v935
    %v937 = vpop.xlane.xlu0 %936
    %v938 = vsel %vm934, %v736, -inf
    %939 = vmax.xlane.f32.xlu0 %v938
    %v940 = vpop.xlane.xlu0 %939
    %v941 = vsub.f32 %v735, %v937
    %v942 = vsub.f32 %v736, %v940
    %v943 = vmul.f32 %v941, 1.442695
    %v944 = vpow.pop %v943
    %v945 = vmul.f32 %v942, 1.442695
    %v946 = vpow.pop %v945
    %949 = vrot.lane.b32.xlu0 %v944, 64
    %v950 = vpop.permute.xlu0 %949
    %951 = vrot.lane.b32.xlu0 %v946, 64
    %v952 = vpop.permute.xlu0 %951
    %v955 = vsel %vm150, %v950, 0.0
    %956 = vadd.xlane.f32.xlu0 %v955
    %v957 = vpop.xlane.xlu0 %956
    %v958 = vsel %vm150, %v952, 0.0
    %959 = vadd.xlane.f32.xlu0 %v958
    %v960 = vpop.xlane.xlu0 %959
    %v961 = vlog2.pop %v957
    %v962 = vmul.f32 %v961, 0.6931472
    %v963 = vlog2.pop %v960
    %v964 = vmul.f32 %v963, 0.6931472
    %v965 = vsub.f32 %v941, %v962
    %v966 = vsub.f32 %v942, %v964
    %vm967 = vcmask 1048320
    %v968 = vsel %vm967, %v735, -inf
    %969 = vmax.xlane.f32.xlu0 %v968
    %v970 = vpop.xlane.xlu0 %969
    %v971 = vsel %vm967, %v736, -inf
    %972 = vmax.xlane.f32.xlu0 %v971
    %v973 = vpop.xlane.xlu0 %972
    %v974 = vsub.f32 %v735, %v970
    %v975 = vsub.f32 %v736, %v973
    %v976 = vmul.f32 %v974, 1.442695
    %v977 = vpow.pop %v976
    %v978 = vmul.f32 %v975, 1.442695
    %v979 = vpow.pop %v978
    %982 = vrot.lane.b32.xlu0 %v977, 32
    %v983 = vpop.permute.xlu0 %982
    %984 = vrot.lane.b32.xlu0 %v979, 32
    %v985 = vpop.permute.xlu0 %984
    %v988 = vsel %vm150, %v983, 0.0
    %989 = vadd.xlane.f32.xlu0 %v988
    %v990 = vpop.xlane.xlu0 %989
    %v991 = vsel %vm150, %v985, 0.0
    %992 = vadd.xlane.f32.xlu0 %v991
    %v993 = vpop.xlane.xlu0 %992
    %v994 = vlog2.pop %v990
    %v995 = vmul.f32 %v994, 0.6931472
    %v996 = vlog2.pop %v993
    %v997 = vmul.f32 %v996, 0.6931472
    %v998 = vsub.f32 %v974, %v995
    %v999 = vsub.f32 %v975, %v997
    %1002 = vrot.lane.b32.xlu0 %v932, 96
    %v1003 = vpop.permute.xlu0 %1002
    %1004 = vrot.lane.b32.xlu0 %v933, 96
    %v1005 = vpop.permute.xlu0 %1004
    %v1008 = vsub.f32 %v867, %v1003
    %v1009 = vsub.f32 %v868, %v1005
    %v1010 = vmul.f32 %v871, %v1008
    %v1011 = vmul.f32 %v872, %v1009
    %v1012 = vsel %vm150, %v1010, 0.0
    %1013 = vadd.xlane.f32.xlu0 %v1012
    %v1014 = vpop.xlane.xlu0 %1013
    %v1015 = vsel %vm150, %v1011, 0.0
    %1016 = vadd.xlane.f32.xlu0 %v1015
    %v1017 = vpop.xlane.xlu0 %1016
    %v1018 = vadd.f32 %v1014, %v1017
    %v1019 = vrot.slane %v1018, 4
    %v1020 = vadd.f32 %v1018, %v1019
    %v1021 = vrot.slane %v1020, 2
    %v1022 = vadd.f32 %v1020, %v1021
    %v1023 = vrot.slane %v1022, 1
    %v1024 = vadd.f32 %v1022, %v1023
    %v1025 = vadd.f32 %v1024, 0.0
    %1028 = vrot.lane.b32.xlu0 %v965, 64
    %v1029 = vpop.permute.xlu0 %1028
    %1030 = vrot.lane.b32.xlu0 %v966, 64
    %v1031 = vpop.permute.xlu0 %1030
    %v1034 = vsub.f32 %v867, %v1029
    %v1035 = vsub.f32 %v868, %v1031
    %v1036 = vmul.f32 %v871, %v1034
    %v1037 = vmul.f32 %v872, %v1035
    %v1038 = vsel %vm150, %v1036, 0.0
    %1039 = vadd.xlane.f32.xlu0 %v1038
    %v1040 = vpop.xlane.xlu0 %1039
    %v1041 = vsel %vm150, %v1037, 0.0
    %1042 = vadd.xlane.f32.xlu0 %v1041
    %v1043 = vpop.xlane.xlu0 %1042
    %v1044 = vadd.f32 %v1040, %v1043
    %v1045 = vrot.slane %v1044, 4
    %v1046 = vadd.f32 %v1044, %v1045
    %v1047 = vrot.slane %v1046, 2
    %v1048 = vadd.f32 %v1046, %v1047
    %v1049 = vrot.slane %v1048, 1
    %v1050 = vadd.f32 %v1048, %v1049
    %v1051 = vadd.f32 %v1025, %v1050
    %1054 = vrot.lane.b32.xlu0 %v998, 32
    %v1055 = vpop.permute.xlu0 %1054
    %1056 = vrot.lane.b32.xlu0 %v999, 32
    %v1057 = vpop.permute.xlu0 %1056
    %v1060 = vsub.f32 %v867, %v1055
    %v1061 = vsub.f32 %v868, %v1057
    %v1062 = vmul.f32 %v871, %v1060
    %v1063 = vmul.f32 %v872, %v1061
    %v1064 = vsel %vm150, %v1062, 0.0
    %1065 = vadd.xlane.f32.xlu0 %v1064
    %v1066 = vpop.xlane.xlu0 %1065
    %v1067 = vsel %vm150, %v1063, 0.0
    %1068 = vadd.xlane.f32.xlu0 %v1067
    %v1069 = vpop.xlane.xlu0 %1068
    %v1070 = vadd.f32 %v1066, %v1069
    %v1071 = vrot.slane %v1070, 4
    %v1072 = vadd.f32 %v1070, %v1071
    %v1073 = vrot.slane %v1072, 2
    %v1074 = vadd.f32 %v1072, %v1073
    %v1075 = vrot.slane %v1074, 1
    %v1076 = vadd.f32 %v1074, %v1075
    %v1077 = vadd.f32 %v1051, %v1076
    %v1078 = vsub.f32 %v895, %v1003
    %v1079 = vsub.f32 %v896, %v1005
    %v1080 = vmul.f32 %v899, %v1078
    %v1081 = vmul.f32 %v900, %v1079
    %v1082 = vsel %vm150, %v1080, 0.0
    %1083 = vadd.xlane.f32.xlu0 %v1082
    %v1084 = vpop.xlane.xlu0 %1083
    %v1085 = vsel %vm150, %v1081, 0.0
    %1086 = vadd.xlane.f32.xlu0 %v1085
    %v1087 = vpop.xlane.xlu0 %1086
    %v1088 = vadd.f32 %v1084, %v1087
    %v1089 = vrot.slane %v1088, 4
    %v1090 = vadd.f32 %v1088, %v1089
    %v1091 = vrot.slane %v1090, 2
    %v1092 = vadd.f32 %v1090, %v1091
    %v1093 = vrot.slane %v1092, 1
    %v1094 = vadd.f32 %v1092, %v1093
    %v1095 = vadd.f32 %v1077, %v1094
    %v1096 = vsub.f32 %v895, %v1029
    %v1097 = vsub.f32 %v896, %v1031
    %v1098 = vmul.f32 %v899, %v1096
    %v1099 = vmul.f32 %v900, %v1097
    %v1100 = vsel %vm150, %v1098, 0.0
    %1101 = vadd.xlane.f32.xlu0 %v1100
    %v1102 = vpop.xlane.xlu0 %1101
    %v1103 = vsel %vm150, %v1099, 0.0
    %1104 = vadd.xlane.f32.xlu0 %v1103
    %v1105 = vpop.xlane.xlu0 %1104
    %v1106 = vadd.f32 %v1102, %v1105
    %v1107 = vrot.slane %v1106, 4
    %v1108 = vadd.f32 %v1106, %v1107
    %v1109 = vrot.slane %v1108, 2
    %v1110 = vadd.f32 %v1108, %v1109
    %v1111 = vrot.slane %v1110, 1
    %v1112 = vadd.f32 %v1110, %v1111
    %v1113 = vadd.f32 %v1095, %v1112
    %v1114 = vsub.f32 %v895, %v1055
    %v1115 = vsub.f32 %v896, %v1057
    %v1116 = vmul.f32 %v899, %v1114
    %v1117 = vmul.f32 %v900, %v1115
    %v1118 = vsel %vm150, %v1116, 0.0
    %1119 = vadd.xlane.f32.xlu0 %v1118
    %v1120 = vpop.xlane.xlu0 %1119
    %v1121 = vsel %vm150, %v1117, 0.0
    %1122 = vadd.xlane.f32.xlu0 %v1121
    %v1123 = vpop.xlane.xlu0 %1122
    %v1124 = vadd.f32 %v1120, %v1123
    %v1125 = vrot.slane %v1124, 4
    %v1126 = vadd.f32 %v1124, %v1125
    %v1127 = vrot.slane %v1126, 2
    %v1128 = vadd.f32 %v1126, %v1127
    %v1129 = vrot.slane %v1128, 1
    %v1130 = vadd.f32 %v1128, %v1129
    %v1131 = vadd.f32 %v1113, %v1130
    %v1132 = vmul.f32 %v1131, 0.083333336
    %1133 = vst.msk [vmem:[#allocation8] sm:$0x1] %vm824, %v1132
    %v1134 = vsub.f32 %v744, %v766
    %v1135 = vsub.f32 %v745, %v768
    %v1136 = vrcp.pop %v761
    %v1137 = vrcp.pop %v764
    %v1138 = vmul.f32 %v747, %v1136
    %v1139 = vmul.f32 %v749, %v1137
    %v1140 = vsel %vm737, %v733, -inf
    %1141 = vmax.xlane.f32.xlu0 %v1140
    %v1142 = vpop.xlane.xlu0 %1141
    %v1143 = vsel %vm737, %v734, -inf
    %1144 = vmax.xlane.f32.xlu0 %v1143
    %v1145 = vpop.xlane.xlu0 %1144
    %v1146 = vsub.f32 %v733, %v1142
    %v1147 = vsub.f32 %v734, %v1145
    %v1148 = vmul.f32 %v1146, 1.442695
    %v1149 = vpow.pop %v1148
    %v1150 = vmul.f32 %v1147, 1.442695
    %v1151 = vpow.pop %v1150
    %1154 = vrot.lane.b32.xlu0 %v1149, 96
    %v1155 = vpop.permute.xlu0 %1154
    %1156 = vrot.lane.b32.xlu0 %v1151, 96
    %v1157 = vpop.permute.xlu0 %1156
    %v1160 = vsel %vm758, %v1155, 0.0
    %1161 = vadd.xlane.f32.xlu0 %v1160
    %v1162 = vpop.xlane.xlu0 %1161
    %v1163 = vsel %vm758, %v1157, 0.0
    %1164 = vadd.xlane.f32.xlu0 %v1163
    %v1165 = vpop.xlane.xlu0 %1164
    %v1166 = vlog2.pop %v1162
    %v1167 = vmul.f32 %v1166, 0.6931472
    %v1168 = vlog2.pop %v1165
    %v1169 = vmul.f32 %v1168, 0.6931472
    %v1170 = vsub.f32 %v1146, %v1167
    %v1171 = vsub.f32 %v1147, %v1169
    %v1172 = vsub.f32 %v1134, %v1170
    %v1173 = vsub.f32 %v1135, %v1171
    %v1174 = vmul.f32 %v1138, %v1172
    %v1175 = vmul.f32 %v1139, %v1173
    %1178 = vrot.lane.b32.xlu0 %v1174, 96
    %v1179 = vpop.permute.xlu0 %1178
    %1180 = vrot.lane.b32.xlu0 %v1175, 96
    %v1181 = vpop.permute.xlu0 %1180
    %v1184 = vsel %vm758, %v1179, 0.0
    %1185 = vadd.xlane.f32.xlu0 %v1184
    %v1186 = vpop.xlane.xlu0 %1185
    %v1187 = vsel %vm758, %v1181, 0.0
    %1188 = vadd.xlane.f32.xlu0 %v1187
    %v1189 = vpop.xlane.xlu0 %1188
    %v1190 = vadd.f32 %v1186, %v1189
    %v1191 = vrot.slane %v1190, 4
    %v1192 = vadd.f32 %v1190, %v1191
    %v1193 = vrot.slane %v1192, 2
    %v1194 = vadd.f32 %v1192, %v1193
    %v1195 = vrot.slane %v1194, 1
    %v1196 = vadd.f32 %v1194, %v1195
    %v1197 = vmul.f32 %v1196, 0.5
    %1198 = vst.msk [vmem:[#allocation9] sm:$0x1] %vm824, %v1197
    // Predicated region
    $region30: #{student_search_forward.1} parent=1 // pred_check
      _
    $region31: #{student_search_forward.1} parent=1 // pred_check_branch
      %1200 = sbr.rel (0) target = $region33
    $region32: #{student_search_forward.1} parent=1 // pred_region
      %s1202 = ssub.s32 16, 16
      %1203 = vsyncadd [#allocation3], %s1202
      %s1205 = sshll.u32 [#allocation5], 4
      %s1206 = int_to_ptr.vmem [resolvable:$true] %s1205
      %1208 = dma.vmem_to_hbm [thread:$0]  %s1206, 16, %s6, [#allocation3]
    $region33: #{student_search_forward.1} parent=1 // pred_fallthru
      _
    // Predicated region
    $region34: #{student_search_forward.1} parent=1 // pred_check
      _
    $region35: #{student_search_forward.1} parent=1 // pred_check_branch
      %1210 = sbr.rel (0) target = $region37
    $region36: #{student_search_forward.1} parent=1 // pred_region
      %s1212 = ssub.s32 16, 16
      %1213 = vsyncadd [#allocation7], %s1212
      %s1215 = sshll.u32 [#allocation6], 4
      %s1216 = int_to_ptr.vmem [resolvable:$true] %s1215
      %1218 = dma.vmem_to_hbm [thread:$0]  %s1216, 16, %s7, [#allocation7]
    $region37: #{student_search_forward.1} parent=1 // pred_fallthru
      _
    // Predicated region
    $region38: #{student_search_forward.1} parent=1 // pred_check
      _
    $region39: #{student_search_forward.1} parent=1 // pred_check_branch
      %1220 = sbr.rel (0) target = $region41
    $region40: #{student_search_forward.1} parent=1 // pred_region
      %s1222 = ssub.s32 16, 16
      %1223 = vsyncadd [#allocation7], %s1222
      %s1225 = sshll.u32 [#allocation8], 4
      %s1226 = int_to_ptr.vmem [resolvable:$true] %s1225
      %1228 = dma.vmem_to_hbm [thread:$0]  %s1226, 16, %s8, [#allocation7]
    $region41: #{student_search_forward.1} parent=1 // pred_fallthru
      _
    // Predicated region
    $region42: #{student_search_forward.1} parent=1 // pred_check
      _
    $region43: #{student_search_forward.1} parent=1 // pred_check_branch
      %1230 = sbr.rel (0) target = $region45
    $region44: #{student_search_forward.1} parent=1 // pred_region
      %s1232 = ssub.s32 16, 16
      %1233 = vsyncadd [#allocation10], %s1232
      %s1235 = sshll.u32 [#allocation9], 4
      %s1236 = int_to_ptr.vmem [resolvable:$true] %s1235
      %1238 = dma.vmem_to_hbm [thread:$0]  %s1236, 16, %s9, [#allocation10]
    $region45: #{student_search_forward.1} parent=1 // pred_fallthru
      _
    // Predicated region
    $region46: #{student_search_forward.1} parent=1 // pred_check
      _
    $region47: #{student_search_forward.1} parent=1 // pred_check_branch
      %1240 = sbr.rel (0) target = $region49
    $region48: #{student_search_forward.1} parent=1 // pred_region
      %1241 = dma.done [#allocation3], 16
    $region49: #{student_search_forward.1} parent=1 // pred_fallthru
      _
    // Predicated region
    $region50: #{student_search_forward.1} parent=1 // pred_check
      _
    $region51: #{student_search_forward.1} parent=1 // pred_check_branch
      %1243 = sbr.rel (0) target = $region53
    $region52: #{student_search_forward.1} parent=1 // pred_region
      %1244 = dma.done [#allocation7], 16
    $region53: #{student_search_forward.1} parent=1 // pred_fallthru
      _
    // Predicated region
    $region54: #{student_search_forward.1} parent=1 // pred_check
      _
    $region55: #{student_search_forward.1} parent=1 // pred_check_branch
      %1246 = sbr.rel (0) target = $region57
    $region56: #{student_search_forward.1} parent=1 // pred_region
      %1247 = dma.done [#allocation7], 16
    $region57: #{student_search_forward.1} parent=1 // pred_fallthru
      _
    // Predicated region
    $region58: #{student_search_forward.1} parent=1 // pred_check
      _
    $region59: #{student_search_forward.1} parent=1 // pred_check_branch
      %1249 = sbr.rel (0) target = $region61
    $region60: #{student_search_forward.1} parent=1 // pred_region
      %1250 = dma.done [#allocation10], 16
    $region61: #{student_search_forward.1} parent=1 // pred_fallthru
      _
    %1251 = vsyncpa [#allocation3], 1
    %1252 = vsyncpa [#allocation7], 1
    %1253 = vsyncpa [#allocation10], 1
    %1254 = vsyncpa [#allocation4], 1

</llo_original>
